<compile_context>
chip_gen: v6e
topology: v6e:2x2x1
jax: 0.10.0
libtpu: 0.0.40
codegen_flags: <defaults>
</compile_context>

<pallas_src>
import functools

import jax
import jax.numpy as jnp
from jax.experimental import pallas as pl
from jax.experimental.pallas import tpu as pltpu

BN_EPS = 1e-3  # matches nn.BatchNorm1d(hidden_size, eps=0.001)


def megablock_kernel(x_ref, dw_ref, pw_ref, bnb_ref, w1t_ref, w2t_ref,
                     wrt_ref, rb_ref, o_ref):
    # x_ref / o_ref : (Bt, C, T)   Bt batch rows in the caller's NCT layout
    # dw_ref        : (NB, K, C)   depthwise taps (tap-major, channels on lanes), f32
    # pw_ref        : (NB, C, C)   pointwise weights (Cin, Cout), BN scale pre-folded
    # bnb_ref       : (NB, 1, C)   folded BatchNorm shifts, f32
    # w1t_ref       : (C, Cr)      SE Linear1 weight, pre-transposed, f32
    # w2t_ref       : (Cr, C)      SE Linear2 weight, pre-transposed, f32
    # wrt_ref       : (C, C)       residual 1x1 weight (Cin, Cout), BN scale pre-folded
    # rb_ref        : (1, C)       folded residual BatchNorm shift, f32
    Bt, C, T = x_ref.shape
    NB, K, _ = dw_ref.shape
    pad = (K - 1) // 2
    M = Bt * T

    # NCT -> (Bt*T, C): channels lane-dense, batch*time on sublanes.  The transpose
    # happens in VMEM (XLU), so the wrapper needs no standalone HBM transpose pass.
    x = jnp.transpose(x_ref[...], (0, 2, 1)).reshape(M, C).astype(jnp.float32)

    # Per-row time index within its own sequence.  pltpu.roll wraps across sequence
    # boundaries; gating rows whose source index falls outside [0, T) reproduces the
    # zero 'same' padding of the PyTorch depthwise conv exactly.
    t_idx = jax.lax.broadcasted_iota(jnp.int32, (Bt, T, 1), 1).reshape(M, 1)
    tap_gate = [
        jnp.logical_and(t_idx + (k - pad) >= 0,
                        t_idx + (k - pad) < T).astype(jnp.float32)     # (M, 1)
        for k in range(K)
    ]

    # ---- base blocks: depthwise conv -> pointwise conv (BN folded) -> (ReLU) ----
    h = x
    for n in range(NB):
        dw_n = dw_ref[n]                                     # (K, C) f32
        acc = h * dw_n[pad:pad + 1, :]                       # centre tap (no shift)
        for k in range(K):
            d = k - pad
            if d == 0:
                continue
            rolled = pltpu.roll(h, shift=(-d) % M, axis=0)   # XLU sublane rotate
            acc = acc + (rolled * tap_gate[k]) * dw_n[k:k + 1, :]
        # pointwise 1x1 conv == (Bt*T, C) x (C, C) on the MXU (bf16 in, f32 acc);
        # the BatchNorm scale is already folded into pw columns, only the shift remains.
        h = jnp.dot(acc.astype(pw_ref.dtype), pw_ref[n],
                    preferred_element_type=jnp.float32)
        h = h + bnb_ref[n]
        if n < NB - 1:
            h = jnp.maximum(h, 0.0)                          # ReLU (all but last block)

    # ---- squeeze & excitation (per sequence) ----
    # TODO(synk): the mean is over the full T tile; padded variable-length sequences
    # would need a length-masked mean.
    h3 = h.reshape(Bt, T, C)
    s = jnp.mean(h3, axis=1)                                 # (Bt, C)
    e = jnp.maximum(
        jnp.dot(s, w1t_ref[...], preferred_element_type=jnp.float32), 0.0)
    ratios = jax.nn.sigmoid(
        jnp.dot(e, w2t_ref[...], preferred_element_type=jnp.float32))   # (Bt, C)
    se_out = (h3 * ratios[:, None, :]).reshape(M, C)

    # ---- residual branch: 1x1 conv (BN scale folded) + shift, add, ReLU ----
    res = jnp.dot(x.astype(wrt_ref.dtype), wrt_ref[...],
                  preferred_element_type=jnp.float32)
    out = jnp.maximum(res + rb_ref[...] + se_out, 0.0)

    # Back to the caller's NCT layout for a direct store.
    o_ref[...] = jnp.transpose(out.reshape(Bt, T, C), (0, 2, 1)).astype(o_ref.dtype)


def _round_up(n, m):
    return -(-n // m) * m


def _largest_divisor_at_most(n, cap):
    cap = max(1, min(n, cap))
    while n % cap:
        cap -= 1
    return cap


def _resident_spec(shape):
    """Constant-index weight block: never re-DMA'd, so single-buffer it (saves VMEM)."""
    index_map = lambda b: (0,) * len(shape)
    try:
        return pl.BlockSpec(shape, index_map, pipeline_mode=pl.Buffered(1))
    except TypeError:  # older BlockSpec signature without pipeline_mode
        return pl.BlockSpec(shape, index_map)


@functools.partial(jax.jit, static_argnames=("use_bf16_matmul",))
def megablock_forward(x, params, *, use_bf16_matmul=True):
    """MegaBlock forward.  x: (B, C, T) in the PyTorch NCT layout.

    Pass bf16 `x` to halve HBM DMA bytes; all accumulation stays f32 in-kernel.
    """
    B, C, T = x.shape
    dw_w = params["dw_weight"]            # (NB, C, K)  depthwise Conv1d weights
    pw_w = params["pw_weight"]            # (NB, Cout, Cin) pointwise Conv1d weights
    NB, _, K = dw_w.shape
    Cr = params["se_w1"].shape[0]
    assert K % 2 == 1, "kernel_size must be odd for PyTorch 'same' padding"
    f32 = jnp.float32
    mm_dtype = jnp.bfloat16 if use_bf16_matmul else f32

    # ---- one-time weight folding (wrapper side, outside the kernel) ----
    bn_scale = params["bn_gamma"] / jnp.sqrt(params["bn_var"] + BN_EPS)    # (NB, C)
    bn_shift = params["bn_beta"] - params["bn_mean"] * bn_scale            # (NB, C)
    r_scale = params["res_gamma"] / jnp.sqrt(params["res_var"] + BN_EPS)   # (C,)
    r_shift = params["res_beta"] - params["res_mean"] * r_scale            # (C,)

    dw = jnp.transpose(dw_w, (0, 2, 1)).astype(f32)                        # (NB, K, C)
    pw = jnp.transpose(pw_w, (0, 2, 1)) * bn_scale[:, None, :]             # (NB, Cin, Cout)
    wrt = params["res_weight"].T * r_scale[None, :]                        # (Cin, Cout)
    w1t = params["se_w1"].T.astype(f32)                                    # (C, Cr)
    w2t = params["se_w2"].T.astype(f32)                                    # (Cr, C)

    # ---- lane-dense channel padding (no-op when C is already a multiple of 128,
    #      e.g. production TitaNet hidden_size=1024) ----
    Cp = _round_up(C, 128)
    Crp = _round_up(Cr, 128)
    if Cp != C:
        x_p = jnp.pad(x, ((0, 0), (0, Cp - C), (0, 0)))
        dw = jnp.pad(dw, ((0, 0), (0, 0), (0, Cp - C)))
        pw = jnp.pad(pw, ((0, 0), (0, Cp - C), (0, Cp - C)))
        wrt = jnp.pad(wrt, ((0, Cp - C), (0, Cp - C)))
        bn_shift = jnp.pad(bn_shift, ((0, 0), (0, Cp - C)))
        r_shift = jnp.pad(r_shift, ((0, Cp - C),))
        w1t = jnp.pad(w1t, ((0, Cp - C), (0, 0)))
        w2t = jnp.pad(w2t, ((0, 0), (0, Cp - C)))
    else:
        x_p = x
    if Crp != Cr:
        w1t = jnp.pad(w1t, ((0, 0), (0, Crp - Cr)))
        w2t = jnp.pad(w2t, ((0, Crp - Cr), (0, 0)))

    bn_shift = bn_shift.reshape(NB, 1, Cp).astype(f32)
    r_shift = r_shift.reshape(1, Cp).astype(f32)
    pw = pw.astype(mm_dtype)
    wrt = wrt.astype(mm_dtype)

    # ---- per-generation VMEM budget & batch folding ----
    try:
        vmem_phys = pltpu.get_tpu_info().vmem_capacity_bytes   # 64 MiB v7x, 128 MiB v5e/v6e
    except Exception:
        vmem_phys = 64 << 20
    # Fold enough batch rows per grid step to fill MXU rows (Bt*T >= 256 when possible)
    # while keeping the fp32 in-kernel working set (~10 live (Bt*T, Cp) slabs) inside
    # a fraction of VMEM.
    temps_budget = max(8 << 20, int(0.35 * vmem_phys))
    bt_rows = max(1, -(-256 // T))
    bt_mem = max(1, temps_budget // (10 * T * Cp * 4))
    Bt = _largest_divisor_at_most(B, min(bt_rows, bt_mem))
    if B // Bt < 2 and Bt > 1 and (Bt // 2) * T >= 256:
        # keep both v7x TensorCores busy when it does not hurt MXU row fill
        Bt = _largest_divisor_at_most(B, Bt // 2)
    grid = (B // Bt,)

    io_bytes = 2 * 2 * Bt * Cp * T * x_p.dtype.itemsize           # x + out, double-buffered
    weight_bytes = sum(int(a.size) * a.dtype.itemsize
                       for a in (dw, pw, bn_shift, w1t, w2t, wrt, r_shift))
    temp_bytes = 10 * Bt * T * Cp * 4                              # live f32 temporaries
    needed = io_bytes + weight_bytes + temp_bytes + (4 << 20)      # + Mosaic scratch headroom
    vmem_limit = int(min(int(0.9 * vmem_phys), max(needed, 32 << 20)))
    # TODO(synk): for very long T on v7x (needed > VMEM) add a T-tile grid axis with a
    # (K-1)-row halo and a streaming two-pass SE; typical TitaNet block lengths fit.

    out_p = pl.pallas_call(
        megablock_kernel,
        out_shape=jax.ShapeDtypeStruct((B, Cp, T), x_p.dtype),
        grid_spec=pltpu.PrefetchScalarGridSpec(
            num_scalar_prefetch=0,
            grid=grid,
            in_specs=[
                pl.BlockSpec((Bt, Cp, T), lambda b: (b, 0, 0)),
                _resident_spec((NB, K, Cp)),
                _resident_spec((NB, Cp, Cp)),
                _resident_spec((NB, 1, Cp)),
                _resident_spec((Cp, Crp)),
                _resident_spec((Crp, Cp)),
                _resident_spec((Cp, Cp)),
                _resident_spec((1, Cp)),
            ],
            out_specs=pl.BlockSpec((Bt, Cp, T), lambda b: (b, 0, 0)),
        ),
        compiler_params=pltpu.CompilerParams(
            dimension_semantics=("parallel",),
            vmem_limit_bytes=vmem_limit,
        ),
    )(x_p, dw, pw, bn_shift, w1t, w2t, wrt, r_shift)

    return out_p if Cp == C else out_p[:, :C, :]


def reference_megablock(x, params):
    """Pure-JAX reference matching the PyTorch MegaBlock eval-mode forward (NCT)."""
    B, C, T = x.shape
    dw_w = params["dw_weight"]
    pw_w = params["pw_weight"]
    NB, _, K = dw_w.shape
    pad = (K - 1) // 2

    def bn(h, gamma, beta, mean, var):
        inv = gamma / jnp.sqrt(var + BN_EPS)
        return (h - mean[None, :, None]) * inv[None, :, None] + beta[None, :, None]

    h = x
    for n in range(NB):
        w = dw_w[n]                                            # (C, K)
        hp = jnp.pad(h, ((0, 0), (0, 0), (pad, K - 1 - pad)))
        acc = jnp.zeros_like(h)
        for k in range(K):
            acc = acc + hp[:, :, k:k + T] * w[None, :, k:k + 1]
        h = jnp.einsum("oc,bct->bot", pw_w[n], acc)            # 1x1 conv
        h = bn(h, params["bn_gamma"][n], params["bn_beta"][n],
               params["bn_mean"][n], params["bn_var"][n])
        if n < NB - 1:
            h = jnp.maximum(h, 0.0)

    s = jnp.mean(h, axis=-1)                                   # (B, C)
    e = jnp.maximum(s @ params["se_w1"].T, 0.0)
    r = jax.nn.sigmoid(e @ params["se_w2"].T)
    h = h * r[:, :, None]

    res = jnp.einsum("oc,bct->bot", params["res_weight"], x)
    res = bn(res, params["res_gamma"], params["res_beta"],
             params["res_mean"], params["res_var"])
    return jnp.maximum(res + h, 0.0)


if __name__ == "__main__":
    # Small shapes consistent with the module:
    # hidden_size=32, kernel_size=3, reduction_rate=4, num_blocks=3, seq len T=16.
    B, C, T = 2, 32, 16
    K = 3
    num_blocks = 3
    reduction_rate = 4
    Cr = C // reduction_rate

    key = jax.random.PRNGKey(0)
    ks = jax.random.split(key, 12)

    def uni(k, shape, fan_in):
        b = 1.0 / jnp.sqrt(jnp.float32(fan_in))
        return jax.random.uniform(k, shape, jnp.float32, -b, b)

    x = jax.random.normal(ks[0], (B, C, T), dtype=jnp.float32)

    params = {
        # depthwise Conv1d(C, C, K, groups=C, bias=False): weight (C, 1, K) -> (C, K)
        "dw_weight": uni(ks[1], (num_blocks, C, K), K),
        # pointwise Conv1d(C, C, 1, bias=False): weight (C, C, 1) -> (C_out, C_in)
        "pw_weight": uni(ks[2], (num_blocks, C, C), C),
        # BatchNorm1d(C, eps=1e-3) per base block (eval-mode running statistics)
        "bn_gamma": 1.0 + 0.1 * jax.random.normal(ks[3], (num_blocks, C), jnp.float32),
        "bn_beta": 0.1 * jax.random.normal(ks[4], (num_blocks, C), jnp.float32),
        "bn_mean": 0.1 * jax.random.normal(ks[5], (num_blocks, C), jnp.float32),
        "bn_var": 1.0 + 0.1 * jax.random.uniform(ks[6], (num_blocks, C), jnp.float32),
        # SqueezeExcitation: Linear(C, Cr, bias=False), Linear(Cr, C, bias=False)
        "se_w1": uni(ks[7], (Cr, C), C),
        "se_w2": uni(ks[8], (C, Cr), Cr),
        # residual_connection: Conv1d(C, C, 1, bias=False) + BatchNorm1d(C, eps=1e-3)
        "res_weight": uni(ks[9], (C, C), C),
        "res_gamma": 1.0 + 0.1 * jax.random.normal(ks[10], (C,), jnp.float32),
        "res_beta": 0.1 * jax.random.normal(ks[11], (C,), jnp.float32),
        "res_mean": jnp.zeros((C,), jnp.float32),
        "res_var": jnp.ones((C,), jnp.float32),
    }

    ref = reference_megablock(x, params)

    # Fast path: bf16 pointwise/residual matmuls with f32 accumulation.
    out_bf16 = jax.block_until_ready(megablock_forward(x, params))
    assert out_bf16.shape == (B, C, T)
    assert jnp.allclose(out_bf16, ref, atol=3e-2, rtol=3e-2), (
        f"bf16 path mismatch: max abs err {jnp.max(jnp.abs(out_bf16 - ref))}")

    # Full-precision path: should match the reference tightly.
    out_f32 = jax.block_until_ready(
        megablock_forward(x, params, use_bf16_matmul=False))
    assert jnp.allclose(out_f32, ref, atol=1e-3, rtol=1e-3), (
        f"f32 path mismatch: max abs err {jnp.max(jnp.abs(out_f32 - ref))}")

    print("KERNEL_OK")
</pallas_src>

<mosaic_0001>
module attributes {stable_mosaic.version = 11 : i64} {
  func.func @megablock_kernel(%arg0: i32, %arg1: memref<2x128x16xf32, #tpu.memory_space<vmem>>, %arg2: memref<3x3x128xf32, #tpu.memory_space<vmem>>, %arg3: memref<3x128x128xbf16, #tpu.memory_space<vmem>>, %arg4: memref<3x1x128xf32, #tpu.memory_space<vmem>>, %arg5: memref<128x128xf32, #tpu.memory_space<vmem>>, %arg6: memref<128x128xf32, #tpu.memory_space<vmem>>, %arg7: memref<128x128xbf16, #tpu.memory_space<vmem>>, %arg8: memref<1x128xf32, #tpu.memory_space<vmem>>, %arg9: memref<2x128x16xf32, #tpu.memory_space<vmem>>) attributes {dimension_semantics = [#tpu.dimension_semantics<parallel>], iteration_bounds = array<i64: 1>, scalar_prefetch = 0 : i64, scratch_operands = 0 : i64, tpu.core_type = #tpu.core_type<tc>, window_params = [{transform_indices = @transform_0, window_bounds = array<i64: 2, 128, 16>}, {pipeline_mode = #tpu.pipeline_mode<synchronous>, transform_indices = @transform_1, window_bounds = array<i64: 3, 3, 128>}, {pipeline_mode = #tpu.pipeline_mode<synchronous>, transform_indices = @transform_2, window_bounds = array<i64: 3, 128, 128>}, {pipeline_mode = #tpu.pipeline_mode<synchronous>, transform_indices = @transform_3, window_bounds = array<i64: 3, 1, 128>}, {pipeline_mode = #tpu.pipeline_mode<synchronous>, transform_indices = @transform_4, window_bounds = array<i64: 128, 128>}, {pipeline_mode = #tpu.pipeline_mode<synchronous>, transform_indices = @transform_5, window_bounds = array<i64: 128, 128>}, {pipeline_mode = #tpu.pipeline_mode<synchronous>, transform_indices = @transform_6, window_bounds = array<i64: 128, 128>}, {pipeline_mode = #tpu.pipeline_mode<synchronous>, transform_indices = @transform_7, window_bounds = array<i64: 1, 128>}, {transform_indices = @transform_8, window_bounds = array<i64: 2, 128, 16>}]} {
    %c0 = arith.constant 0 : index
    %c0_0 = arith.constant 0 : index
    %c0_1 = arith.constant 0 : index
    %0 = vector.load %arg1[%c0, %c0_0, %c0_1] : memref<2x128x16xf32, #tpu.memory_space<vmem>>, vector<2x128x16xf32>
    %1 = tpu.transpose %0, [0, 2, 1] : vector<2x128x16xf32> -> vector<2x16x128xf32>
    %2 = vector.shape_cast %1 : vector<2x16x128xf32> to vector<32x128xf32>
    %3 = tpu.iota {dimensions = array<i32: 1>} : vector<2x16x1xi32>
    %4 = vector.shape_cast %3 : vector<2x16x1xi32> to vector<32x1xi32>
    %c-1_i32 = arith.constant -1 : i32
    %5 = vector.broadcast %c-1_i32 : i32 to vector<32x1xi32>
    %6 = arith.addi %4, %5 : vector<32x1xi32>
    %c0_i32 = arith.constant 0 : i32
    %7 = vector.broadcast %c0_i32 : i32 to vector<32x1xi32>
    %8 = arith.cmpi sge, %6, %7 : vector<32x1xi32>
    %c-1_i32_2 = arith.constant -1 : i32
    %9 = vector.broadcast %c-1_i32_2 : i32 to vector<32x1xi32>
    %10 = arith.addi %4, %9 : vector<32x1xi32>
    %c16_i32 = arith.constant 16 : i32
    %11 = vector.broadcast %c16_i32 : i32 to vector<32x1xi32>
    %12 = arith.cmpi slt, %10, %11 : vector<32x1xi32>
    %13 = arith.andi %8, %12 : vector<32x1xi1>
    %14 = arith.extui %13 : vector<32x1xi1> to vector<32x1xi32>
    %15 = arith.sitofp %14 : vector<32x1xi32> to vector<32x1xf32>
    %c1_i32 = arith.constant 1 : i32
    %16 = vector.broadcast %c1_i32 : i32 to vector<32x1xi32>
    %17 = arith.addi %4, %16 : vector<32x1xi32>
    %c0_i32_3 = arith.constant 0 : i32
    %18 = vector.broadcast %c0_i32_3 : i32 to vector<32x1xi32>
    %19 = arith.cmpi sge, %17, %18 : vector<32x1xi32>
    %c1_i32_4 = arith.constant 1 : i32
    %20 = vector.broadcast %c1_i32_4 : i32 to vector<32x1xi32>
    %21 = arith.addi %4, %20 : vector<32x1xi32>
    %c16_i32_5 = arith.constant 16 : i32
    %22 = vector.broadcast %c16_i32_5 : i32 to vector<32x1xi32>
    %23 = arith.cmpi slt, %21, %22 : vector<32x1xi32>
    %24 = arith.andi %19, %23 : vector<32x1xi1>
    %25 = arith.extui %24 : vector<32x1xi1> to vector<32x1xi32>
    %26 = arith.sitofp %25 : vector<32x1xi32> to vector<32x1xf32>
    %c0_6 = arith.constant 0 : index
    %c0_7 = arith.constant 0 : index
    %c0_8 = arith.constant 0 : index
    %27 = vector.load %arg2[%c0_6, %c0_7, %c0_8] : memref<3x3x128xf32, #tpu.memory_space<vmem>>, vector<1x3x128xf32>
    %28 = vector.shape_cast %27 : vector<1x3x128xf32> to vector<3x128xf32>
    %29 = vector.extract_strided_slice %28 {offsets = [1, 0], sizes = [1, 128], strides = [1, 1]} : vector<3x128xf32> to vector<1x128xf32>
    %30 = vector.broadcast %29 : vector<1x128xf32> to vector<32x128xf32>
    %31 = arith.mulf %2, %30 : vector<32x128xf32>
    %c1_i32_9 = arith.constant 1 : i32
    %32 = tpu.dynamic_rotate %2 by %c1_i32_9 dim 0 : vector<32x128xf32>, i32 -> vector<32x128xf32>
    %33 = vector.broadcast %15 : vector<32x1xf32> to vector<32x128xf32>
    %34 = arith.mulf %32, %33 : vector<32x128xf32>
    %35 = vector.extract_strided_slice %28 {offsets = [0, 0], sizes = [1, 128], strides = [1, 1]} : vector<3x128xf32> to vector<1x128xf32>
    %36 = vector.broadcast %35 : vector<1x128xf32> to vector<32x128xf32>
    %37 = arith.mulf %34, %36 : vector<32x128xf32>
    %38 = arith.addf %31, %37 : vector<32x128xf32>
    %c31_i32 = arith.constant 31 : i32
    %39 = tpu.dynamic_rotate %2 by %c31_i32 dim 0 : vector<32x128xf32>, i32 -> vector<32x128xf32>
    %40 = vector.broadcast %26 : vector<32x1xf32> to vector<32x128xf32>
    %41 = arith.mulf %39, %40 : vector<32x128xf32>
    %42 = vector.extract_strided_slice %28 {offsets = [2, 0], sizes = [1, 128], strides = [1, 1]} : vector<3x128xf32> to vector<1x128xf32>
    %43 = vector.broadcast %42 : vector<1x128xf32> to vector<32x128xf32>
    %44 = arith.mulf %41, %43 : vector<32x128xf32>
    %45 = arith.addf %38, %44 : vector<32x128xf32>
    %46 = arith.truncf %45 : vector<32x128xf32> to vector<32x128xbf16>
    %c0_10 = arith.constant 0 : index
    %c0_11 = arith.constant 0 : index
    %c0_12 = arith.constant 0 : index
    %47 = vector.load %arg3[%c0_10, %c0_11, %c0_12] : memref<3x128x128xbf16, #tpu.memory_space<vmem>>, vector<1x128x128xbf16>
    %48 = vector.shape_cast %47 : vector<1x128x128xbf16> to vector<128x128xbf16>
    %cst = arith.constant dense<0.000000e+00> : vector<32x128xf32>
    %49 = tpu.matmul %46, %48, %cst {dimension_numbers = #tpu.dot_dimension_numbers<[1], [0], [0], [1], [0, 0, 1, 1], [], []>} : vector<32x128xbf16>, vector<128x128xbf16>, vector<32x128xf32> -> vector<32x128xf32>
    %c0_13 = arith.constant 0 : index
    %c0_14 = arith.constant 0 : index
    %c0_15 = arith.constant 0 : index
    %50 = vector.load %arg4[%c0_13, %c0_14, %c0_15] : memref<3x1x128xf32, #tpu.memory_space<vmem>>, vector<1x1x128xf32>
    %51 = vector.shape_cast %50 : vector<1x1x128xf32> to vector<1x128xf32>
    %52 = vector.broadcast %51 : vector<1x128xf32> to vector<32x128xf32>
    %53 = arith.addf %49, %52 : vector<32x128xf32>
    %cst_16 = arith.constant 0.000000e+00 : f32
    %54 = vector.broadcast %cst_16 : f32 to vector<32x128xf32>
    %55 = arith.maximumf %53, %54 : vector<32x128xf32>
    %c1 = arith.constant 1 : index
    %c0_17 = arith.constant 0 : index
    %c0_18 = arith.constant 0 : index
    %56 = vector.load %arg2[%c1, %c0_17, %c0_18] : memref<3x3x128xf32, #tpu.memory_space<vmem>>, vector<1x3x128xf32>
    %57 = vector.shape_cast %56 : vector<1x3x128xf32> to vector<3x128xf32>
    %58 = vector.extract_strided_slice %57 {offsets = [1, 0], sizes = [1, 128], strides = [1, 1]} : vector<3x128xf32> to vector<1x128xf32>
    %59 = vector.broadcast %58 : vector<1x128xf32> to vector<32x128xf32>
    %60 = arith.mulf %55, %59 : vector<32x128xf32>
    %c1_i32_19 = arith.constant 1 : i32
    %61 = tpu.dynamic_rotate %55 by %c1_i32_19 dim 0 : vector<32x128xf32>, i32 -> vector<32x128xf32>
    %62 = vector.broadcast %15 : vector<32x1xf32> to vector<32x128xf32>
    %63 = arith.mulf %61, %62 : vector<32x128xf32>
    %64 = vector.extract_strided_slice %57 {offsets = [0, 0], sizes = [1, 128], strides = [1, 1]} : vector<3x128xf32> to vector<1x128xf32>
    %65 = vector.broadcast %64 : vector<1x128xf32> to vector<32x128xf32>
    %66 = arith.mulf %63, %65 : vector<32x128xf32>
    %67 = arith.addf %60, %66 : vector<32x128xf32>
    %c31_i32_20 = arith.constant 31 : i32
    %68 = tpu.dynamic_rotate %55 by %c31_i32_20 dim 0 : vector<32x128xf32>, i32 -> vector<32x128xf32>
    %69 = vector.broadcast %26 : vector<32x1xf32> to vector<32x128xf32>
    %70 = arith.mulf %68, %69 : vector<32x128xf32>
    %71 = vector.extract_strided_slice %57 {offsets = [2, 0], sizes = [1, 128], strides = [1, 1]} : vector<3x128xf32> to vector<1x128xf32>
    %72 = vector.broadcast %71 : vector<1x128xf32> to vector<32x128xf32>
    %73 = arith.mulf %70, %72 : vector<32x128xf32>
    %74 = arith.addf %67, %73 : vector<32x128xf32>
    %75 = arith.truncf %74 : vector<32x128xf32> to vector<32x128xbf16>
    %c1_21 = arith.constant 1 : index
    %c0_22 = arith.constant 0 : index
    %c0_23 = arith.constant 0 : index
    %76 = vector.load %arg3[%c1_21, %c0_22, %c0_23] : memref<3x128x128xbf16, #tpu.memory_space<vmem>>, vector<1x128x128xbf16>
    %77 = vector.shape_cast %76 : vector<1x128x128xbf16> to vector<128x128xbf16>
    %cst_24 = arith.constant dense<0.000000e+00> : vector<32x128xf32>
    %78 = tpu.matmul %75, %77, %cst_24 {dimension_numbers = #tpu.dot_dimension_numbers<[1], [0], [0], [1], [0, 0, 1, 1], [], []>} : vector<32x128xbf16>, vector<128x128xbf16>, vector<32x128xf32> -> vector<32x128xf32>
    %c1_25 = arith.constant 1 : index
    %c0_26 = arith.constant 0 : index
    %c0_27 = arith.constant 0 : index
    %79 = vector.load %arg4[%c1_25, %c0_26, %c0_27] : memref<3x1x128xf32, #tpu.memory_space<vmem>>, vector<1x1x128xf32>
    %80 = vector.shape_cast %79 : vector<1x1x128xf32> to vector<1x128xf32>
    %81 = vector.broadcast %80 : vector<1x128xf32> to vector<32x128xf32>
    %82 = arith.addf %78, %81 : vector<32x128xf32>
    %cst_28 = arith.constant 0.000000e+00 : f32
    %83 = vector.broadcast %cst_28 : f32 to vector<32x128xf32>
    %84 = arith.maximumf %82, %83 : vector<32x128xf32>
    %c2 = arith.constant 2 : index
    %c0_29 = arith.constant 0 : index
    %c0_30 = arith.constant 0 : index
    %85 = vector.load %arg2[%c2, %c0_29, %c0_30] : memref<3x3x128xf32, #tpu.memory_space<vmem>>, vector<1x3x128xf32>
    %86 = vector.shape_cast %85 : vector<1x3x128xf32> to vector<3x128xf32>
    %87 = vector.extract_strided_slice %86 {offsets = [1, 0], sizes = [1, 128], strides = [1, 1]} : vector<3x128xf32> to vector<1x128xf32>
    %88 = vector.broadcast %87 : vector<1x128xf32> to vector<32x128xf32>
    %89 = arith.mulf %84, %88 : vector<32x128xf32>
    %c1_i32_31 = arith.constant 1 : i32
    %90 = tpu.dynamic_rotate %84 by %c1_i32_31 dim 0 : vector<32x128xf32>, i32 -> vector<32x128xf32>
    %91 = vector.broadcast %15 : vector<32x1xf32> to vector<32x128xf32>
    %92 = arith.mulf %90, %91 : vector<32x128xf32>
    %93 = vector.extract_strided_slice %86 {offsets = [0, 0], sizes = [1, 128], strides = [1, 1]} : vector<3x128xf32> to vector<1x128xf32>
    %94 = vector.broadcast %93 : vector<1x128xf32> to vector<32x128xf32>
    %95 = arith.mulf %92, %94 : vector<32x128xf32>
    %96 = arith.addf %89, %95 : vector<32x128xf32>
    %c31_i32_32 = arith.constant 31 : i32
    %97 = tpu.dynamic_rotate %84 by %c31_i32_32 dim 0 : vector<32x128xf32>, i32 -> vector<32x128xf32>
    %98 = vector.broadcast %26 : vector<32x1xf32> to vector<32x128xf32>
    %99 = arith.mulf %97, %98 : vector<32x128xf32>
    %100 = vector.extract_strided_slice %86 {offsets = [2, 0], sizes = [1, 128], strides = [1, 1]} : vector<3x128xf32> to vector<1x128xf32>
    %101 = vector.broadcast %100 : vector<1x128xf32> to vector<32x128xf32>
    %102 = arith.mulf %99, %101 : vector<32x128xf32>
    %103 = arith.addf %96, %102 : vector<32x128xf32>
    %104 = arith.truncf %103 : vector<32x128xf32> to vector<32x128xbf16>
    %c2_33 = arith.constant 2 : index
    %c0_34 = arith.constant 0 : index
    %c0_35 = arith.constant 0 : index
    %105 = vector.load %arg3[%c2_33, %c0_34, %c0_35] : memref<3x128x128xbf16, #tpu.memory_space<vmem>>, vector<1x128x128xbf16>
    %106 = vector.shape_cast %105 : vector<1x128x128xbf16> to vector<128x128xbf16>
    %cst_36 = arith.constant dense<0.000000e+00> : vector<32x128xf32>
    %107 = tpu.matmul %104, %106, %cst_36 {dimension_numbers = #tpu.dot_dimension_numbers<[1], [0], [0], [1], [0, 0, 1, 1], [], []>} : vector<32x128xbf16>, vector<128x128xbf16>, vector<32x128xf32> -> vector<32x128xf32>
    %c2_37 = arith.constant 2 : index
    %c0_38 = arith.constant 0 : index
    %c0_39 = arith.constant 0 : index
    %108 = vector.load %arg4[%c2_37, %c0_38, %c0_39] : memref<3x1x128xf32, #tpu.memory_space<vmem>>, vector<1x1x128xf32>
    %109 = vector.shape_cast %108 : vector<1x1x128xf32> to vector<1x128xf32>
    %110 = vector.broadcast %109 : vector<1x128xf32> to vector<32x128xf32>
    %111 = arith.addf %107, %110 : vector<32x128xf32>
    %112 = vector.shape_cast %111 : vector<32x128xf32> to vector<2x16x128xf32>
    %cst_40 = arith.constant dense<0.000000e+00> : vector<2x128xf32>
    %113 = vector.multi_reduction <add>, %112, %cst_40 [1] : vector<2x16x128xf32> to vector<2x128xf32>
    %cst_41 = arith.constant 1.600000e+01 : f32
    %114 = vector.broadcast %cst_41 : f32 to vector<2x128xf32>
    %115 = arith.divf %113, %114 : vector<2x128xf32>
    %c0_42 = arith.constant 0 : index
    %c0_43 = arith.constant 0 : index
    %116 = vector.load %arg5[%c0_42, %c0_43] : memref<128x128xf32, #tpu.memory_space<vmem>>, vector<128x128xf32>
    %cst_44 = arith.constant dense<0.000000e+00> : vector<2x128xf32>
    %117 = tpu.matmul %115, %116, %cst_44 {dimension_numbers = #tpu.dot_dimension_numbers<[1], [0], [0], [1], [0, 0, 1, 1], [], []>} : vector<2x128xf32>, vector<128x128xf32>, vector<2x128xf32> -> vector<2x128xf32>
    %cst_45 = arith.constant 0.000000e+00 : f32
    %118 = vector.broadcast %cst_45 : f32 to vector<2x128xf32>
    %119 = arith.maximumf %117, %118 : vector<2x128xf32>
    %c0_46 = arith.constant 0 : index
    %c0_47 = arith.constant 0 : index
    %120 = vector.load %arg6[%c0_46, %c0_47] : memref<128x128xf32, #tpu.memory_space<vmem>>, vector<128x128xf32>
    %cst_48 = arith.constant dense<0.000000e+00> : vector<2x128xf32>
    %121 = tpu.matmul %119, %120, %cst_48 {dimension_numbers = #tpu.dot_dimension_numbers<[1], [0], [0], [1], [0, 0, 1, 1], [], []>} : vector<2x128xf32>, vector<128x128xf32>, vector<2x128xf32> -> vector<2x128xf32>
    %122 = arith.negf %121 : vector<2x128xf32>
    %123 = math.exp %122 : vector<2x128xf32>
    %cst_49 = arith.constant 1.000000e+00 : f32
    %124 = vector.broadcast %cst_49 : f32 to vector<2x128xf32>
    %125 = arith.addf %124, %123 : vector<2x128xf32>
    %126 = arith.divf %124, %125 : vector<2x128xf32>
    %127 = vector.shape_cast %126 : vector<2x128xf32> to vector<2x1x128xf32>
    %128 = vector.broadcast %127 : vector<2x1x128xf32> to vector<2x16x128xf32>
    %129 = arith.mulf %112, %128 : vector<2x16x128xf32>
    %130 = vector.shape_cast %129 : vector<2x16x128xf32> to vector<32x128xf32>
    %131 = arith.truncf %2 : vector<32x128xf32> to vector<32x128xbf16>
    %c0_50 = arith.constant 0 : index
    %c0_51 = arith.constant 0 : index
    %132 = vector.load %arg7[%c0_50, %c0_51] : memref<128x128xbf16, #tpu.memory_space<vmem>>, vector<128x128xbf16>
    %cst_52 = arith.constant dense<0.000000e+00> : vector<32x128xf32>
    %133 = tpu.matmul %131, %132, %cst_52 {dimension_numbers = #tpu.dot_dimension_numbers<[1], [0], [0], [1], [0, 0, 1, 1], [], []>} : vector<32x128xbf16>, vector<128x128xbf16>, vector<32x128xf32> -> vector<32x128xf32>
    %c0_53 = arith.constant 0 : index
    %c0_54 = arith.constant 0 : index
    %134 = vector.load %arg8[%c0_53, %c0_54] : memref<1x128xf32, #tpu.memory_space<vmem>>, vector<1x128xf32>
    %135 = vector.broadcast %134 : vector<1x128xf32> to vector<32x128xf32>
    %136 = arith.addf %133, %135 : vector<32x128xf32>
    %137 = arith.addf %136, %130 : vector<32x128xf32>
    %cst_55 = arith.constant 0.000000e+00 : f32
    %138 = vector.broadcast %cst_55 : f32 to vector<32x128xf32>
    %139 = arith.maximumf %137, %138 : vector<32x128xf32>
    %140 = vector.shape_cast %139 : vector<32x128xf32> to vector<2x16x128xf32>
    %141 = tpu.transpose %140, [0, 2, 1] : vector<2x16x128xf32> -> vector<2x128x16xf32>
    %c0_56 = arith.constant 0 : index
    %c0_57 = arith.constant 0 : index
    %c0_58 = arith.constant 0 : index
    %142 = vector.load %arg9[%c0_56, %c0_57, %c0_58] : memref<2x128x16xf32, #tpu.memory_space<vmem>>, vector<2x128x16xf32>
    tpu.vector_store %arg9[%c0_56, %c0_57, %c0_58], %141 {strides = array<i32>} : memref<2x128x16xf32, #tpu.memory_space<vmem>>, vector<2x128x16xf32>,
    return
  }
  func.func @transform_0(%arg0: i32) -> (i32, i32, i32) {
    %c0_i32 = arith.constant 0 : i32
    %c0_i32_0 = arith.constant 0 : i32
    %c0_i32_1 = arith.constant 0 : i32
    return %arg0, %c0_i32, %c0_i32_0 : i32, i32, i32
  }
  func.func @transform_1(%arg0: i32) -> (i32, i32, i32) {
    %c0_i32 = arith.constant 0 : i32
    %c0_i32_0 = arith.constant 0 : i32
    %c0_i32_1 = arith.constant 0 : i32
    %c0_i32_2 = arith.constant 0 : i32
    return %c0_i32, %c0_i32_0, %c0_i32_1 : i32, i32, i32
  }
  func.func @transform_2(%arg0: i32) -> (i32, i32, i32) {
    %c0_i32 = arith.constant 0 : i32
    %c0_i32_0 = arith.constant 0 : i32
    %c0_i32_1 = arith.constant 0 : i32
    %c0_i32_2 = arith.constant 0 : i32
    return %c0_i32, %c0_i32_0, %c0_i32_1 : i32, i32, i32
  }
  func.func @transform_3(%arg0: i32) -> (i32, i32, i32) {
    %c0_i32 = arith.constant 0 : i32
    %c0_i32_0 = arith.constant 0 : i32
    %c0_i32_1 = arith.constant 0 : i32
    %c0_i32_2 = arith.constant 0 : i32
    return %c0_i32, %c0_i32_0, %c0_i32_1 : i32, i32, i32
  }
  func.func @transform_4(%arg0: i32) -> (i32, i32) {
    %c0_i32 = arith.constant 0 : i32
    %c0_i32_0 = arith.constant 0 : i32
    %c0_i32_1 = arith.constant 0 : i32
    return %c0_i32, %c0_i32_0 : i32, i32
  }
  func.func @transform_5(%arg0: i32) -> (i32, i32) {
    %c0_i32 = arith.constant 0 : i32
    %c0_i32_0 = arith.constant 0 : i32
    %c0_i32_1 = arith.constant 0 : i32
    return %c0_i32, %c0_i32_0 : i32, i32
  }
  func.func @transform_6(%arg0: i32) -> (i32, i32) {
    %c0_i32 = arith.constant 0 : i32
    %c0_i32_0 = arith.constant 0 : i32
    %c0_i32_1 = arith.constant 0 : i32
    return %c0_i32, %c0_i32_0 : i32, i32
  }
  func.func @transform_7(%arg0: i32) -> (i32, i32) {
    %c0_i32 = arith.constant 0 : i32
    %c0_i32_0 = arith.constant 0 : i32
    %c0_i32_1 = arith.constant 0 : i32
    return %c0_i32, %c0_i32_0 : i32, i32
  }
  func.func @transform_8(%arg0: i32) -> (i32, i32, i32) {
    %c0_i32 = arith.constant 0 : i32
    %c0_i32_0 = arith.constant 0 : i32
    %c0_i32_1 = arith.constant 0 : i32
    return %arg0, %c0_i32, %c0_i32_0 : i32, i32, i32
  }
}

</mosaic_0001>

<llo_original>
// kernel: megablock_forward.1
$region0: #{megablock_forward.1}
  #allocation0 [shape = 'u32[]', space=smem, size = 0x4, offset = 0x4, fixed_abs, tag = 'smem constant byte address 0x4 - core index']
  #allocation1 [shape = 'u32[144,128]{1,0:T(1,128)}', space=vmem, size = 0x12000, scoped, tag = 'internal scratch']
  %s0 = inlined_call_operand.vmem [shape: f32[2,128,16], index: 0, kind: input, shape index: {}]
  %s1 = inlined_call_operand.vmem [shape: f32[3,3,128], index: 1, kind: input, shape index: {}]
  %s2 = inlined_call_operand.vmem [shape: bf16[3,128,128], index: 2, kind: input, shape index: {}]
  %s3 = inlined_call_operand.vmem [shape: f32[3,1,128], index: 3, kind: input, shape index: {}]
  %s4 = inlined_call_operand.vmem [shape: f32[128,128], index: 4, kind: input, shape index: {}]
  %s5 = inlined_call_operand.vmem [shape: f32[128,128], index: 5, kind: input, shape index: {}]
  %s6 = inlined_call_operand.vmem [shape: bf16[128,128], index: 6, kind: input, shape index: {}]
  %s7 = inlined_call_operand.vmem [shape: f32[1,128], index: 7, kind: input, shape index: {}]
  %s8 = inlined_call_operand.vmem [shape: f32[2,128,16], index: 8, kind: output, shape index: {}]
  %s9 = sld [smem:[#allocation0]]
  $region42: #{megablock_forward.1} parent=0
    _
  %s11 = ssub.s32 1, %s9
  %s12 = scalar_select 0, %s11, %s9
  // Predicated region
  $region2: #{megablock_forward.1} parent=0 // pred_check
    _
  $region3: #{megablock_forward.1} parent=0 // pred_check_branch
    %14 = sbr.rel (0) target = $region5
  $region4: #{megablock_forward.1} parent=0 // pred_region
    _
  $region5: #{megablock_forward.1} parent=0 // pred_fallthru
    _
  // Predicated region
  $region6: #{megablock_forward.1} parent=0 // pred_check
    _
  $region7: #{megablock_forward.1} parent=0 // pred_check_branch
    %16 = sbr.rel (0) target = $region9
  $region8: #{megablock_forward.1} parent=0 // pred_region
    _
  $region9: #{megablock_forward.1} parent=0 // pred_fallthru
    _
  // Predicated region
  $region10: #{megablock_forward.1} parent=0 // pred_check
    _
  $region11: #{megablock_forward.1} parent=0 // pred_check_branch
    %18 = sbr.rel (0) target = $region13
  $region12: #{megablock_forward.1} parent=0 // pred_region
    _
  $region13: #{megablock_forward.1} parent=0 // pred_fallthru
    _
  // Predicated region
  $region14: #{megablock_forward.1} parent=0 // pred_check
    _
  $region15: #{megablock_forward.1} parent=0 // pred_check_branch
    %20 = sbr.rel (0) target = $region17
  $region16: #{megablock_forward.1} parent=0 // pred_region
    _
  $region17: #{megablock_forward.1} parent=0 // pred_fallthru
    _
  // Predicated region
  $region18: #{megablock_forward.1} parent=0 // pred_check
    _
  $region19: #{megablock_forward.1} parent=0 // pred_check_branch
    %22 = sbr.rel (0) target = $region21
  $region20: #{megablock_forward.1} parent=0 // pred_region
    _
  $region21: #{megablock_forward.1} parent=0 // pred_fallthru
    _
  // Predicated region
  $region22: #{megablock_forward.1} parent=0 // pred_check
    _
  $region23: #{megablock_forward.1} parent=0 // pred_check_branch
    %24 = sbr.rel (0) target = $region25
  $region24: #{megablock_forward.1} parent=0 // pred_region
    _
  $region25: #{megablock_forward.1} parent=0 // pred_fallthru
    _
  // Predicated region
  $region26: #{megablock_forward.1} parent=0 // pred_check
    _
  $region27: #{megablock_forward.1} parent=0 // pred_check_branch
    %26 = sbr.rel (0) target = $region29
  $region28: #{megablock_forward.1} parent=0 // pred_region
    _
  $region29: #{megablock_forward.1} parent=0 // pred_fallthru
    _
  // Predicated region
  $region30: #{megablock_forward.1} parent=0 // pred_check
    _
  $region31: #{megablock_forward.1} parent=0 // pred_check_branch
    %28 = sbr.rel (0) target = $region33
  $region32: #{megablock_forward.1} parent=0 // pred_region
    _
  $region33: #{megablock_forward.1} parent=0 // pred_fallthru
    _
  %v30 = vld [vmem:[%s0] sm:$0xff]
  %v31 = vld [vmem:[%s0 + $0x8] sm:$0xff]
  %v32 = vld [vmem:[%s0 + $0x10] sm:$0xff]
  %v33 = vld [vmem:[%s0 + $0x18] sm:$0xff]
  %v34 = vld [vmem:[%s0 + $0x20] sm:$0xff]
  %v35 = vld [vmem:[%s0 + $0x28] sm:$0xff]
  %v36 = vld [vmem:[%s0 + $0x30] sm:$0xff]
  %v37 = vld [vmem:[%s0 + $0x38] sm:$0xff]
  %v38 = vld [vmem:[%s0 + $0x40] sm:$0xff]
  %v39 = vld [vmem:[%s0 + $0x48] sm:$0xff]
  %v40 = vld [vmem:[%s0 + $0x50] sm:$0xff]
  %v41 = vld [vmem:[%s0 + $0x58] sm:$0xff]
  %v42 = vld [vmem:[%s0 + $0x60] sm:$0xff]
  %v43 = vld [vmem:[%s0 + $0x68] sm:$0xff]
  %v44 = vld [vmem:[%s0 + $0x70] sm:$0xff]
  %v45 = vld [vmem:[%s0 + $0x78] sm:$0xff]
  %v46 = vld [vmem:[%s0 + $0x80] sm:$0xff]
  %v47 = vld [vmem:[%s0 + $0x88] sm:$0xff]
  %v48 = vld [vmem:[%s0 + $0x90] sm:$0xff]
  %v49 = vld [vmem:[%s0 + $0x98] sm:$0xff]
  %v50 = vld [vmem:[%s0 + $0xa0] sm:$0xff]
  %v51 = vld [vmem:[%s0 + $0xa8] sm:$0xff]
  %v52 = vld [vmem:[%s0 + $0xb0] sm:$0xff]
  %v53 = vld [vmem:[%s0 + $0xb8] sm:$0xff]
  %v54 = vld [vmem:[%s0 + $0xc0] sm:$0xff]
  %v55 = vld [vmem:[%s0 + $0xc8] sm:$0xff]
  %v56 = vld [vmem:[%s0 + $0xd0] sm:$0xff]
  %v57 = vld [vmem:[%s0 + $0xd8] sm:$0xff]
  %v58 = vld [vmem:[%s0 + $0xe0] sm:$0xff]
  %v59 = vld [vmem:[%s0 + $0xe8] sm:$0xff]
  %v60 = vld [vmem:[%s0 + $0xf0] sm:$0xff]
  %v61 = vld [vmem:[%s0 + $0xf8] sm:$0xff]
  %62 = vxpose.xlu0.b32.start [1/16] %v30, 128
  %63 = vxpose.xlu0.b32.cont [2/16] %v31, 128
  %64 = vxpose.xlu0.b32.cont [3/16] %v32, 128
  %65 = vxpose.xlu0.b32.cont [4/16] %v33, 128
  %66 = vxpose.xlu0.b32.cont [5/16] %v34, 128
  %67 = vxpose.xlu0.b32.cont [6/16] %v35, 128
  %68 = vxpose.xlu0.b32.cont [7/16] %v36, 128
  %69 = vxpose.xlu0.b32.cont [8/16] %v37, 128
  %70 = vxpose.xlu0.b32.cont [9/16] %v38, 128
  %71 = vxpose.xlu0.b32.cont [10/16] %v39, 128
  %72 = vxpose.xlu0.b32.cont [11/16] %v40, 128
  %73 = vxpose.xlu0.b32.cont [12/16] %v41, 128
  %74 = vxpose.xlu0.b32.cont [13/16] %v42, 128
  %75 = vxpose.xlu0.b32.cont [14/16] %v43, 128
  %76 = vxpose.xlu0.b32.cont [15/16] %v44, 128
  %77 = vxpose.xlu0.b32.end [16/16] %v45, 128
  %v78 = vpop.trf.xlu0
  %v79 = vpop.trf.xlu0
  %v80 = vpop.trf.xlu0
  %v81 = vpop.trf.xlu0
  %v82 = vpop.trf.xlu0
  %v83 = vpop.trf.xlu0
  %v84 = vpop.trf.xlu0
  %v85 = vpop.trf.xlu0
  %v86 = vpop.trf.xlu0
  %v87 = vpop.trf.xlu0
  %v88 = vpop.trf.xlu0
  %v89 = vpop.trf.xlu0
  %v90 = vpop.trf.xlu0
  %v91 = vpop.trf.xlu0
  %v92 = vpop.trf.xlu0
  %v93 = vpop.trf.xlu0
  %94 = vxpose.xlu0.b32.start [1/16] %v46, 128
  %95 = vxpose.xlu0.b32.cont [2/16] %v47, 128
  %96 = vxpose.xlu0.b32.cont [3/16] %v48, 128
  %97 = vxpose.xlu0.b32.cont [4/16] %v49, 128
  %98 = vxpose.xlu0.b32.cont [5/16] %v50, 128
  %99 = vxpose.xlu0.b32.cont [6/16] %v51, 128
  %100 = vxpose.xlu0.b32.cont [7/16] %v52, 128
  %101 = vxpose.xlu0.b32.cont [8/16] %v53, 128
  %102 = vxpose.xlu0.b32.cont [9/16] %v54, 128
  %103 = vxpose.xlu0.b32.cont [10/16] %v55, 128
  %104 = vxpose.xlu0.b32.cont [11/16] %v56, 128
  %105 = vxpose.xlu0.b32.cont [12/16] %v57, 128
  %106 = vxpose.xlu0.b32.cont [13/16] %v58, 128
  %107 = vxpose.xlu0.b32.cont [14/16] %v59, 128
  %108 = vxpose.xlu0.b32.cont [15/16] %v60, 128
  %109 = vxpose.xlu0.b32.end [16/16] %v61, 128
  %v110 = vpop.trf.xlu0
  %v111 = vpop.trf.xlu0
  %v112 = vpop.trf.xlu0
  %v113 = vpop.trf.xlu0
  %v114 = vpop.trf.xlu0
  %v115 = vpop.trf.xlu0
  %v116 = vpop.trf.xlu0
  %v117 = vpop.trf.xlu0
  %v118 = vpop.trf.xlu0
  %v119 = vpop.trf.xlu0
  %v120 = vpop.trf.xlu0
  %v121 = vpop.trf.xlu0
  %v122 = vpop.trf.xlu0
  %v123 = vpop.trf.xlu0
  %v124 = vpop.trf.xlu0
  %v125 = vpop.trf.xlu0
  %v126 = vlaneseq
  %v127 = vshrl.u32 %v126, 7
  %v128 = vadd.s32 %v127, 8
  %v129 = vadd.s32 %v127, 4294967295
  %v130 = vadd.s32 %v128, 4294967295
  %vm131 = vcmp.ge.s32.totalorder %v129, 0
  %vm132 = vcmp.ge.s32.totalorder %v130, 0
  %vm133 = vcmp.lt.s32.totalorder %v129, 16
  %vm134 = vcmp.lt.s32.totalorder %v130, 16
  %vm135 = vmand %vm131, %vm133
  %vm136 = vmand %vm132, %vm134
  %v137 = vsel %vm135, 1, 0
  %v138 = vsel %vm136, 1, 0
  %v139 = vcvt.s32.f32 %v137
  %v140 = vcvt.s32.f32 %v138
  %v141 = vadd.s32 %v127, 1
  %v142 = vadd.s32 %v128, 1
  %vm143 = vcmp.ge.s32.totalorder %v141, 0
  %vm144 = vcmp.ge.s32.totalorder %v142, 0
  %vm145 = vcmp.lt.s32.totalorder %v141, 16
  %vm146 = vcmp.lt.s32.totalorder %v142, 16
  %vm147 = vmand %vm143, %vm145
  %vm148 = vmand %vm144, %vm146
  %v149 = vsel %vm147, 1, 0
  %v150 = vsel %vm148, 1, 0
  %v151 = vcvt.s32.f32 %v149
  %v152 = vcvt.s32.f32 %v150
  %v153 = vld [vmem:[%s1] sm:$0x7]
  %v154 = vlaneseq
  %v155 = vshrl.u32 %v154, 7
  %v156 = vsub.s32 1, %v155
  %v157 = vrot.slane %v153, %v156
  %v158 = vmul.f32 %v78, %v157
  %v159 = vmul.f32 %v79, %v157
  %v160 = vmul.f32 %v110, %v157
  %v161 = vmul.f32 %v111, %v157
  %v162 = vrot.slane %v78, 7
  %v163 = vrot.slane %v79, 7
  %v164 = vrot.slane %v110, 7
  %v165 = vrot.slane %v111, 7
  %vm166 = vcmp.lt.s32.totalorder %v127, 1
  %v167 = vsel %vm166, %v164, %v165
  %v168 = vsel %vm166, %v163, %v164
  %v169 = vsel %vm166, %v162, %v163
  %v170 = vsel %vm166, %v165, %v162
  %v171 = vmul.f32 %v170, %v139
  %v172 = vmul.f32 %v169, %v140
  %v173 = vmul.f32 %v168, %v139
  %v174 = vmul.f32 %v167, %v140
  %v175 = vlaneseq
  %v176 = vshrl.u32 %v175, 7
  %v177 = vsub.s32 0, %v176
  %v178 = vrot.slane %v153, %v177
  %v179 = vmul.f32 %v171, %v178
  %v180 = vmul.f32 %v172, %v178
  %v181 = vmul.f32 %v173, %v178
  %v182 = vmul.f32 %v174, %v178
  %v183 = vadd.f32 %v158, %v179
  %v184 = vadd.f32 %v159, %v180
  %v185 = vadd.f32 %v160, %v181
  %v186 = vadd.f32 %v161, %v182
  %v187 = vrot.slane %v78, 1
  %v188 = vrot.slane %v79, 1
  %v189 = vrot.slane %v110, 1
  %v190 = vrot.slane %v111, 1
  %vm191 = vcmp.lt.s32.totalorder %v127, 7
  %v192 = vsel %vm191, %v189, %v190
  %v193 = vsel %vm191, %v188, %v189
  %v194 = vsel %vm191, %v187, %v188
  %v195 = vsel %vm191, %v190, %v187
  %v196 = vmul.f32 %v194, %v151
  %v197 = vmul.f32 %v193, %v152
  %v198 = vmul.f32 %v192, %v151
  %v199 = vmul.f32 %v195, %v152
  %v200 = vlaneseq
  %v201 = vshrl.u32 %v200, 7
  %v202 = vsub.s32 2, %v201
  %v203 = vrot.slane %v153, %v202
  %v204 = vmul.f32 %v196, %v203
  %v205 = vmul.f32 %v197, %v203
  %v206 = vmul.f32 %v198, %v203
  %v207 = vmul.f32 %v199, %v203
  %v208 = vadd.f32 %v183, %v204
  %v209 = vadd.f32 %v184, %v205
  %v210 = vadd.f32 %v185, %v206
  %v211 = vadd.f32 %v186, %v207
  %v212 = vpack.c.bf16 %v209, %v208
  %v213 = vpack.c.bf16 %v211, %v210
  %v214 = vld [vmem:[%s2] sm:$0xf]
  %v215 = vld [vmem:[%s2 + $0x4] sm:$0xf]
  %v216 = vld [vmem:[%s2 + $0x8] sm:$0xf]
  %v217 = vld [vmem:[%s2 + $0xc] sm:$0xf]
  %v218 = vld [vmem:[%s2 + $0x10] sm:$0xf]
  %v219 = vld [vmem:[%s2 + $0x14] sm:$0xf]
  %v220 = vld [vmem:[%s2 + $0x18] sm:$0xf]
  %v221 = vld [vmem:[%s2 + $0x1c] sm:$0xf]
  %v222 = vld [vmem:[%s2 + $0x20] sm:$0xf]
  %v223 = vld [vmem:[%s2 + $0x24] sm:$0xf]
  %v224 = vld [vmem:[%s2 + $0x28] sm:$0xf]
  %v225 = vld [vmem:[%s2 + $0x2c] sm:$0xf]
  %v226 = vld [vmem:[%s2 + $0x30] sm:$0xf]
  %v227 = vld [vmem:[%s2 + $0x34] sm:$0xf]
  %v228 = vld [vmem:[%s2 + $0x38] sm:$0xf]
  %v229 = vld [vmem:[%s2 + $0x3c] sm:$0xf]
  %v230 = vld [vmem:[%s3] sm:$0x1]
  %v232 = vlaneseq
  %v233 = vshrl.u32 %v232, 7
  %v234 = vsub.s32 0, %v233
  %v235 = vrot.slane %v230, %v234
  %v253 = vunpack.c.l.b16 %v214
  %v254 = vunpack.c.l.b16 %v215
  %v255 = vunpack.c.l.b16 %v216
  %v256 = vunpack.c.l.b16 %v217
  %v257 = vunpack.c.l.b16 %v218
  %v258 = vunpack.c.l.b16 %v219
  %v259 = vunpack.c.l.b16 %v220
  %v260 = vunpack.c.l.b16 %v221
  %v261 = vunpack.c.l.b16 %v222
  %v262 = vunpack.c.l.b16 %v223
  %v263 = vunpack.c.l.b16 %v224
  %v264 = vunpack.c.l.b16 %v225
  %v265 = vunpack.c.l.b16 %v226
  %v266 = vunpack.c.l.b16 %v227
  %v267 = vunpack.c.l.b16 %v228
  %v268 = vunpack.c.l.b16 %v229
  %v269 = vpack.c.b16 %v254, %v253
  %v270 = vpack.c.b16 %v256, %v255
  %v271 = vpack.c.b16 %v258, %v257
  %v272 = vpack.c.b16 %v260, %v259
  %v273 = vpack.c.b16 %v262, %v261
  %v274 = vpack.c.b16 %v264, %v263
  %v275 = vpack.c.b16 %v266, %v265
  %v276 = vpack.c.b16 %v268, %v267
  %285 = vmatprep.subr.bf16.mxu0 0
  %286 = vmatpush1.bf16.msra.mxu0 %v276
  %287 = vmatprep.subr.bf16.mxu0 0
  %288 = vmatpush1.bf16.msra.mxu0 %v275
  %289 = vmatprep.subr.bf16.mxu0 0
  %290 = vmatpush1.bf16.msra.mxu0 %v274
  %291 = vmatprep.subr.bf16.mxu0 0
  %292 = vmatpush1.bf16.msra.mxu0 %v273
  %293 = vmatprep.subr.bf16.mxu0 0
  %294 = vmatpush1.bf16.msra.mxu0 %v272
  %295 = vmatprep.subr.bf16.mxu0 0
  %296 = vmatpush1.bf16.msra.mxu0 %v271
  %297 = vmatprep.subr.bf16.mxu0 0
  %298 = vmatpush1.bf16.msra.mxu0 %v270
  %299 = vmatprep.subr.bf16.mxu0 0
  %300 = vmatpush1.bf16.msra.mxu0 %v269
  %301 = vmatprep.subr.bf16.mxu0 0
  %302 = vmatpush2.bf16.msra.mxu0 0
  %303 = vmatprep.subr.bf16.mxu0 0
  %304 = vmatpush2.bf16.msra.mxu0 0
  %305 = vmatprep.subr.bf16.mxu0 0
  %306 = vmatpush2.bf16.msra.mxu0 0
  %307 = vmatprep.subr.bf16.mxu0 0
  %308 = vmatpush2.bf16.msra.mxu0 0
  %309 = vmatprep.subr.bf16.mxu0 0
  %310 = vmatpush2.bf16.msra.mxu0 0
  %311 = vmatprep.subr.bf16.mxu0 0
  %312 = vmatpush2.bf16.msra.mxu0 0
  %313 = vmatprep.subr.bf16.mxu0 0
  %314 = vmatpush2.bf16.msra.mxu0 0
  %315 = vmatprep.subr.bf16.mxu0 0
  %316 = vmatpush2.bf16.msra.mxu0 0
  %317 = vmatprep.mubr.bf16.mxu0 0
  %318 = vmatmul.mubr.bf16.gmra.mxu0 %v212
  %v319 = vpop.f32.mrf.mxu0
  %v320 = vadd.f32 %v235, %v319
  %v321 = vpop.f32.mrf.mxu0
  %v322 = vpop.f32.mrf.mxu0
  %v323 = vadd.f32 %v235, %v322
  %v324 = vpop.f32.mrf.mxu0
  %325 = vmatprep.mubr.bf16.mxu0 0
  %326 = vmatmul.mubr.bf16.gmra.mxu0 %v213
  %v327 = vpop.f32.mrf.mxu0
  %v328 = vadd.f32 %v235, %v327
  %v329 = vpop.f32.mrf.mxu0
  %v330 = vpop.f32.mrf.mxu0
  %v331 = vadd.f32 %v235, %v330
  %v332 = vpop.f32.mrf.mxu0
  %333 = vdwg.mxu0
  %v334 = vmax.f32 %v320, 0.0
  %v335 = vmax.f32 %v323, 0.0
  %v336 = vmax.f32 %v328, 0.0
  %v337 = vmax.f32 %v331, 0.0
  %s338 = scalar_lea.vmem %s1, 4
  %v339 = vld [vmem:[%s338] sm:$0x7]
  %v340 = vlaneseq
  %v341 = vshrl.u32 %v340, 7
  %v342 = vsub.s32 1, %v341
  %v343 = vrot.slane %v339, %v342
  %v344 = vmul.f32 %v334, %v343
  %v345 = vmul.f32 %v335, %v343
  %v346 = vmul.f32 %v336, %v343
  %v347 = vmul.f32 %v337, %v343
  %v348 = vrot.slane %v334, 7
  %v349 = vrot.slane %v335, 7
  %v350 = vrot.slane %v336, 7
  %v351 = vrot.slane %v337, 7
  %v352 = vsel %vm166, %v350, %v351
  %v353 = vsel %vm166, %v349, %v350
  %v354 = vsel %vm166, %v348, %v349
  %v355 = vsel %vm166, %v351, %v348
  %v356 = vmul.f32 %v355, %v139
  %v357 = vmul.f32 %v354, %v140
  %v358 = vmul.f32 %v353, %v139
  %v359 = vmul.f32 %v352, %v140
  %v360 = vlaneseq
  %v361 = vshrl.u32 %v360, 7
  %v362 = vsub.s32 0, %v361
  %v363 = vrot.slane %v339, %v362
  %v364 = vmul.f32 %v356, %v363
  %v365 = vmul.f32 %v357, %v363
  %v366 = vmul.f32 %v358, %v363
  %v367 = vmul.f32 %v359, %v363
  %v368 = vadd.f32 %v344, %v364
  %v369 = vadd.f32 %v345, %v365
  %v370 = vadd.f32 %v346, %v366
  %v371 = vadd.f32 %v347, %v367
  %v372 = vrot.slane %v334, 1
  %v373 = vrot.slane %v335, 1
  %v374 = vrot.slane %v336, 1
  %v375 = vrot.slane %v337, 1
  %v376 = vsel %vm191, %v374, %v375
  %v377 = vsel %vm191, %v373, %v374
  %v378 = vsel %vm191, %v372, %v373
  %v379 = vsel %vm191, %v375, %v372
  %v380 = vmul.f32 %v378, %v151
  %v381 = vmul.f32 %v377, %v152
  %v382 = vmul.f32 %v376, %v151
  %v383 = vmul.f32 %v379, %v152
  %v384 = vlaneseq
  %v385 = vshrl.u32 %v384, 7
  %v386 = vsub.s32 2, %v385
  %v387 = vrot.slane %v339, %v386
  %v388 = vmul.f32 %v380, %v387
  %v389 = vmul.f32 %v381, %v387
  %v390 = vmul.f32 %v382, %v387
  %v391 = vmul.f32 %v383, %v387
  %v392 = vadd.f32 %v368, %v388
  %v393 = vadd.f32 %v369, %v389
  %v394 = vadd.f32 %v370, %v390
  %v395 = vadd.f32 %v371, %v391
  %v396 = vpack.c.bf16 %v393, %v392
  %v397 = vpack.c.bf16 %v395, %v394
  %s398 = scalar_lea.vmem %s2, 64
  %v399 = vld [vmem:[%s398] sm:$0xf]
  %v400 = vld [vmem:[%s398 + $0x4] sm:$0xf]
  %v401 = vld [vmem:[%s398 + $0x8] sm:$0xf]
  %v402 = vld [vmem:[%s398 + $0xc] sm:$0xf]
  %v403 = vld [vmem:[%s398 + $0x10] sm:$0xf]
  %v404 = vld [vmem:[%s398 + $0x14] sm:$0xf]
  %v405 = vld [vmem:[%s398 + $0x18] sm:$0xf]
  %v406 = vld [vmem:[%s398 + $0x1c] sm:$0xf]
  %v407 = vld [vmem:[%s398 + $0x20] sm:$0xf]
  %v408 = vld [vmem:[%s398 + $0x24] sm:$0xf]
  %v409 = vld [vmem:[%s398 + $0x28] sm:$0xf]
  %v410 = vld [vmem:[%s398 + $0x2c] sm:$0xf]
  %v411 = vld [vmem:[%s398 + $0x30] sm:$0xf]
  %v412 = vld [vmem:[%s398 + $0x34] sm:$0xf]
  %v413 = vld [vmem:[%s398 + $0x38] sm:$0xf]
  %v414 = vld [vmem:[%s398 + $0x3c] sm:$0xf]
  %s415 = scalar_lea.vmem %s3, 1
  %v416 = vld [vmem:[%s415] sm:$0x1]
  %v418 = vlaneseq
  %v419 = vshrl.u32 %v418, 7
  %v420 = vsub.s32 0, %v419
  %v421 = vrot.slane %v416, %v420
  %v439 = vunpack.c.l.b16 %v399
  %v440 = vunpack.c.l.b16 %v400
  %v441 = vunpack.c.l.b16 %v401
  %v442 = vunpack.c.l.b16 %v402
  %v443 = vunpack.c.l.b16 %v403
  %v444 = vunpack.c.l.b16 %v404
  %v445 = vunpack.c.l.b16 %v405
  %v446 = vunpack.c.l.b16 %v406
  %v447 = vunpack.c.l.b16 %v407
  %v448 = vunpack.c.l.b16 %v408
  %v449 = vunpack.c.l.b16 %v409
  %v450 = vunpack.c.l.b16 %v410
  %v451 = vunpack.c.l.b16 %v411
  %v452 = vunpack.c.l.b16 %v412
  %v453 = vunpack.c.l.b16 %v413
  %v454 = vunpack.c.l.b16 %v414
  %v455 = vpack.c.b16 %v440, %v439
  %v456 = vpack.c.b16 %v442, %v441
  %v457 = vpack.c.b16 %v444, %v443
  %v458 = vpack.c.b16 %v446, %v445
  %v459 = vpack.c.b16 %v448, %v447
  %v460 = vpack.c.b16 %v450, %v449
  %v461 = vpack.c.b16 %v452, %v451
  %v462 = vpack.c.b16 %v454, %v453
  %471 = vmatprep.subr.bf16.mxu0 0
  %472 = vmatpush1.bf16.msra.mxu0 %v462
  %473 = vmatprep.subr.bf16.mxu0 0
  %474 = vmatpush1.bf16.msra.mxu0 %v461
  %475 = vmatprep.subr.bf16.mxu0 0
  %476 = vmatpush1.bf16.msra.mxu0 %v460
  %477 = vmatprep.subr.bf16.mxu0 0
  %478 = vmatpush1.bf16.msra.mxu0 %v459
  %479 = vmatprep.subr.bf16.mxu0 0
  %480 = vmatpush1.bf16.msra.mxu0 %v458
  %481 = vmatprep.subr.bf16.mxu0 0
  %482 = vmatpush1.bf16.msra.mxu0 %v457
  %483 = vmatprep.subr.bf16.mxu0 0
  %484 = vmatpush1.bf16.msra.mxu0 %v456
  %485 = vmatprep.subr.bf16.mxu0 0
  %486 = vmatpush1.bf16.msra.mxu0 %v455
  %487 = vmatprep.subr.bf16.mxu0 0
  %488 = vmatpush2.bf16.msra.mxu0 0
  %489 = vmatprep.subr.bf16.mxu0 0
  %490 = vmatpush2.bf16.msra.mxu0 0
  %491 = vmatprep.subr.bf16.mxu0 0
  %492 = vmatpush2.bf16.msra.mxu0 0
  %493 = vmatprep.subr.bf16.mxu0 0
  %494 = vmatpush2.bf16.msra.mxu0 0
  %495 = vmatprep.subr.bf16.mxu0 0
  %496 = vmatpush2.bf16.msra.mxu0 0
  %497 = vmatprep.subr.bf16.mxu0 0
  %498 = vmatpush2.bf16.msra.mxu0 0
  %499 = vmatprep.subr.bf16.mxu0 0
  %500 = vmatpush2.bf16.msra.mxu0 0
  %501 = vmatprep.subr.bf16.mxu0 0
  %502 = vmatpush2.bf16.msra.mxu0 0
  %503 = vmatprep.mubr.bf16.mxu0 0
  %504 = vmatmul.mubr.bf16.gmra.mxu0 %v396
  %v505 = vpop.f32.mrf.mxu0
  %v506 = vadd.f32 %v421, %v505
  %v507 = vpop.f32.mrf.mxu0
  %v508 = vpop.f32.mrf.mxu0
  %v509 = vadd.f32 %v421, %v508
  %v510 = vpop.f32.mrf.mxu0
  %511 = vmatprep.mubr.bf16.mxu0 0
  %512 = vmatmul.mubr.bf16.gmra.mxu0 %v397
  %v513 = vpop.f32.mrf.mxu0
  %v514 = vadd.f32 %v421, %v513
  %v515 = vpop.f32.mrf.mxu0
  %v516 = vpop.f32.mrf.mxu0
  %v517 = vadd.f32 %v421, %v516
  %v518 = vpop.f32.mrf.mxu0
  %519 = vdwg.mxu0
  %v520 = vmax.f32 %v506, 0.0
  %v521 = vmax.f32 %v509, 0.0
  %v522 = vmax.f32 %v514, 0.0
  %v523 = vmax.f32 %v517, 0.0
  %s524 = scalar_lea.vmem %s1, 8
  %v525 = vld [vmem:[%s524] sm:$0x7]
  %v526 = vlaneseq
  %v527 = vshrl.u32 %v526, 7
  %v528 = vsub.s32 1, %v527
  %v529 = vrot.slane %v525, %v528
  %v530 = vmul.f32 %v520, %v529
  %v531 = vmul.f32 %v521, %v529
  %v532 = vmul.f32 %v522, %v529
  %v533 = vmul.f32 %v523, %v529
  %v534 = vrot.slane %v520, 7
  %v535 = vrot.slane %v521, 7
  %v536 = vrot.slane %v522, 7
  %v537 = vrot.slane %v523, 7
  %v538 = vsel %vm166, %v536, %v537
  %v539 = vsel %vm166, %v535, %v536
  %v540 = vsel %vm166, %v534, %v535
  %v541 = vsel %vm166, %v537, %v534
  %v542 = vmul.f32 %v541, %v139
  %v543 = vmul.f32 %v540, %v140
  %v544 = vmul.f32 %v539, %v139
  %v545 = vmul.f32 %v538, %v140
  %v546 = vlaneseq
  %v547 = vshrl.u32 %v546, 7
  %v548 = vsub.s32 0, %v547
  %v549 = vrot.slane %v525, %v548
  %v550 = vmul.f32 %v542, %v549
  %v551 = vmul.f32 %v543, %v549
  %v552 = vmul.f32 %v544, %v549
  %v553 = vmul.f32 %v545, %v549
  %v554 = vadd.f32 %v530, %v550
  %v555 = vadd.f32 %v531, %v551
  %v556 = vadd.f32 %v532, %v552
  %v557 = vadd.f32 %v533, %v553
  %v558 = vrot.slane %v520, 1
  %v559 = vrot.slane %v521, 1
  %v560 = vrot.slane %v522, 1
  %v561 = vrot.slane %v523, 1
  %v562 = vsel %vm191, %v560, %v561
  %v563 = vsel %vm191, %v559, %v560
  %v564 = vsel %vm191, %v558, %v559
  %v565 = vsel %vm191, %v561, %v558
  %v566 = vmul.f32 %v564, %v151
  %v567 = vmul.f32 %v563, %v152
  %v568 = vmul.f32 %v562, %v151
  %v569 = vmul.f32 %v565, %v152
  %v570 = vlaneseq
  %v571 = vshrl.u32 %v570, 7
  %v572 = vsub.s32 2, %v571
  %v573 = vrot.slane %v525, %v572
  %v574 = vmul.f32 %v566, %v573
  %v575 = vmul.f32 %v567, %v573
  %v576 = vmul.f32 %v568, %v573
  %v577 = vmul.f32 %v569, %v573
  %v578 = vadd.f32 %v554, %v574
  %v579 = vadd.f32 %v555, %v575
  %v580 = vadd.f32 %v556, %v576
  %v581 = vadd.f32 %v557, %v577
  %v582 = vpack.c.bf16 %v579, %v578
  %v583 = vpack.c.bf16 %v581, %v580
  %s584 = scalar_lea.vmem %s2, 128
  %v585 = vld [vmem:[%s584] sm:$0xf]
  %v586 = vld [vmem:[%s584 + $0x4] sm:$0xf]
  %v587 = vld [vmem:[%s584 + $0x8] sm:$0xf]
  %v588 = vld [vmem:[%s584 + $0xc] sm:$0xf]
  %v589 = vld [vmem:[%s584 + $0x10] sm:$0xf]
  %v590 = vld [vmem:[%s584 + $0x14] sm:$0xf]
  %v591 = vld [vmem:[%s584 + $0x18] sm:$0xf]
  %v592 = vld [vmem:[%s584 + $0x1c] sm:$0xf]
  %v593 = vld [vmem:[%s584 + $0x20] sm:$0xf]
  %v594 = vld [vmem:[%s584 + $0x24] sm:$0xf]
  %v595 = vld [vmem:[%s584 + $0x28] sm:$0xf]
  %v596 = vld [vmem:[%s584 + $0x2c] sm:$0xf]
  %v597 = vld [vmem:[%s584 + $0x30] sm:$0xf]
  %v598 = vld [vmem:[%s584 + $0x34] sm:$0xf]
  %v599 = vld [vmem:[%s584 + $0x38] sm:$0xf]
  %v600 = vld [vmem:[%s584 + $0x3c] sm:$0xf]
  %s601 = scalar_lea.vmem %s3, 2
  %v602 = vld [vmem:[%s601] sm:$0x1]
  %v604 = vlaneseq
  %v605 = vshrl.u32 %v604, 7
  %v606 = vsub.s32 0, %v605
  %v607 = vrot.slane %v602, %v606
  %v625 = vunpack.c.l.b16 %v585
  %v626 = vunpack.c.l.b16 %v586
  %v627 = vunpack.c.l.b16 %v587
  %v628 = vunpack.c.l.b16 %v588
  %v629 = vunpack.c.l.b16 %v589
  %v630 = vunpack.c.l.b16 %v590
  %v631 = vunpack.c.l.b16 %v591
  %v632 = vunpack.c.l.b16 %v592
  %v633 = vunpack.c.l.b16 %v593
  %v634 = vunpack.c.l.b16 %v594
  %v635 = vunpack.c.l.b16 %v595
  %v636 = vunpack.c.l.b16 %v596
  %v637 = vunpack.c.l.b16 %v597
  %v638 = vunpack.c.l.b16 %v598
  %v639 = vunpack.c.l.b16 %v599
  %v640 = vunpack.c.l.b16 %v600
  %v641 = vpack.c.b16 %v626, %v625
  %v642 = vpack.c.b16 %v628, %v627
  %v643 = vpack.c.b16 %v630, %v629
  %v644 = vpack.c.b16 %v632, %v631
  %v645 = vpack.c.b16 %v634, %v633
  %v646 = vpack.c.b16 %v636, %v635
  %v647 = vpack.c.b16 %v638, %v637
  %v648 = vpack.c.b16 %v640, %v639
  %657 = vmatprep.subr.bf16.mxu0 0
  %658 = vmatpush1.bf16.msra.mxu0 %v648
  %659 = vmatprep.subr.bf16.mxu0 0
  %660 = vmatpush1.bf16.msra.mxu0 %v647
  %661 = vmatprep.subr.bf16.mxu0 0
  %662 = vmatpush1.bf16.msra.mxu0 %v646
  %663 = vmatprep.subr.bf16.mxu0 0
  %664 = vmatpush1.bf16.msra.mxu0 %v645
  %665 = vmatprep.subr.bf16.mxu0 0
  %666 = vmatpush1.bf16.msra.mxu0 %v644
  %667 = vmatprep.subr.bf16.mxu0 0
  %668 = vmatpush1.bf16.msra.mxu0 %v643
  %669 = vmatprep.subr.bf16.mxu0 0
  %670 = vmatpush1.bf16.msra.mxu0 %v642
  %671 = vmatprep.subr.bf16.mxu0 0
  %672 = vmatpush1.bf16.msra.mxu0 %v641
  %673 = vmatprep.subr.bf16.mxu0 0
  %674 = vmatpush2.bf16.msra.mxu0 0
  %675 = vmatprep.subr.bf16.mxu0 0
  %676 = vmatpush2.bf16.msra.mxu0 0
  %677 = vmatprep.subr.bf16.mxu0 0
  %678 = vmatpush2.bf16.msra.mxu0 0
  %679 = vmatprep.subr.bf16.mxu0 0
  %680 = vmatpush2.bf16.msra.mxu0 0
  %681 = vmatprep.subr.bf16.mxu0 0
  %682 = vmatpush2.bf16.msra.mxu0 0
  %683 = vmatprep.subr.bf16.mxu0 0
  %684 = vmatpush2.bf16.msra.mxu0 0
  %685 = vmatprep.subr.bf16.mxu0 0
  %686 = vmatpush2.bf16.msra.mxu0 0
  %687 = vmatprep.subr.bf16.mxu0 0
  %688 = vmatpush2.bf16.msra.mxu0 0
  %689 = vmatprep.mubr.bf16.mxu0 0
  %690 = vmatmul.mubr.bf16.gmra.mxu0 %v582
  %v691 = vpop.f32.mrf.mxu0
  %v692 = vadd.f32 %v607, %v691
  %v693 = vpop.f32.mrf.mxu0
  %v694 = vpop.f32.mrf.mxu0
  %v695 = vadd.f32 %v607, %v694
  %v696 = vpop.f32.mrf.mxu0
  %697 = vmatprep.mubr.bf16.mxu0 0
  %698 = vmatmul.mubr.bf16.gmra.mxu0 %v583
  %v699 = vpop.f32.mrf.mxu0
  %v700 = vadd.f32 %v607, %v699
  %v701 = vpop.f32.mrf.mxu0
  %v702 = vpop.f32.mrf.mxu0
  %v703 = vadd.f32 %v607, %v702
  %v704 = vpop.f32.mrf.mxu0
  %705 = vdwg.mxu0
  %v706 = vadd.f32 %v692, %v695
  %v707 = vrot.slane %v706, 4
  %v708 = vadd.f32 %v706, %v707
  %v709 = vrot.slane %v708, 2
  %v710 = vadd.f32 %v708, %v709
  %v711 = vrot.slane %v710, 1
  %v712 = vadd.f32 %v710, %v711
  %v713 = vadd.f32 %v700, %v703
  %v714 = vrot.slane %v713, 4
  %v715 = vadd.f32 %v713, %v714
  %v716 = vrot.slane %v715, 2
  %v717 = vadd.f32 %v715, %v716
  %v718 = vrot.slane %v717, 1
  %v719 = vadd.f32 %v717, %v718
  %v720 = vrcp.pop 16.0
  %v721 = vmul.f32 %v712, %v720
  %v722 = vmul.f32 %v719, %v720
  %v723 = vld [vmem:[%s4] sm:$0xff]
  %v724 = vld [vmem:[%s4 + $0x8] sm:$0xff]
  %v725 = vld [vmem:[%s4 + $0x10] sm:$0xff]
  %v726 = vld [vmem:[%s4 + $0x18] sm:$0xff]
  %v727 = vld [vmem:[%s4 + $0x20] sm:$0xff]
  %v728 = vld [vmem:[%s4 + $0x28] sm:$0xff]
  %v729 = vld [vmem:[%s4 + $0x30] sm:$0xff]
  %v730 = vld [vmem:[%s4 + $0x38] sm:$0xff]
  %v731 = vld [vmem:[%s4 + $0x40] sm:$0xff]
  %v732 = vld [vmem:[%s4 + $0x48] sm:$0xff]
  %v733 = vld [vmem:[%s4 + $0x50] sm:$0xff]
  %v734 = vld [vmem:[%s4 + $0x58] sm:$0xff]
  %v735 = vld [vmem:[%s4 + $0x60] sm:$0xff]
  %v736 = vld [vmem:[%s4 + $0x68] sm:$0xff]
  %v737 = vld [vmem:[%s4 + $0x70] sm:$0xff]
  %v738 = vld [vmem:[%s4 + $0x78] sm:$0xff]
  %vm741 = vcmask 1041409
  %v742 = vsel %vm741, %v722, %v721
  %744 = vmatprep.subr.mxu0 0.0
  %745 = vmatpush1.msra.mxu0 %v738
  %746 = vmatprep.subr.mxu0 0.0
  %747 = vmatpush1.msra.mxu0 %v737
  %748 = vmatprep.subr.mxu0 0.0
  %749 = vmatpush1.msra.mxu0 %v736
  %750 = vmatprep.subr.mxu0 0.0
  %751 = vmatpush1.msra.mxu0 %v735
  %752 = vmatprep.subr.mxu0 0.0
  %753 = vmatpush1.msra.mxu0 %v734
  %754 = vmatprep.subr.mxu0 0.0
  %755 = vmatpush1.msra.mxu0 %v733
  %756 = vmatprep.subr.mxu0 0.0
  %757 = vmatpush1.msra.mxu0 %v732
  %758 = vmatprep.subr.mxu0 0.0
  %759 = vmatpush1.msra.mxu0 %v731
  %760 = vmatprep.subr.mxu0 0.0
  %761 = vmatpush1.msra.mxu0 %v730
  %762 = vmatprep.subr.mxu0 0.0
  %763 = vmatpush1.msra.mxu0 %v729
  %764 = vmatprep.subr.mxu0 0.0
  %765 = vmatpush1.msra.mxu0 %v728
  %766 = vmatprep.subr.mxu0 0.0
  %767 = vmatpush1.msra.mxu0 %v727
  %768 = vmatprep.subr.mxu0 0.0
  %769 = vmatpush1.msra.mxu0 %v726
  %770 = vmatprep.subr.mxu0 0.0
  %771 = vmatpush1.msra.mxu0 %v725
  %772 = vmatprep.subr.mxu0 0.0
  %773 = vmatpush1.msra.mxu0 %v724
  %774 = vmatprep.subr.mxu0 0.0
  %775 = vmatpush1.msra.mxu0 %v723
  %776 = vmatprep.subr.mxu0 0.0
  %777 = vmatpush2.msra.mxu0 0.0
  %778 = vmatprep.subr.mxu0 0.0
  %779 = vmatpush2.msra.mxu0 0.0
  %780 = vmatprep.subr.mxu0 0.0
  %781 = vmatpush2.msra.mxu0 0.0
  %782 = vmatprep.subr.mxu0 0.0
  %783 = vmatpush2.msra.mxu0 0.0
  %784 = vmatprep.subr.mxu0 0.0
  %785 = vmatpush2.msra.mxu0 0.0
  %786 = vmatprep.subr.mxu0 0.0
  %787 = vmatpush2.msra.mxu0 0.0
  %788 = vmatprep.subr.mxu0 0.0
  %789 = vmatpush2.msra.mxu0 0.0
  %790 = vmatprep.subr.mxu0 0.0
  %791 = vmatpush2.msra.mxu0 0.0
  %792 = vmatprep.subr.mxu0 0.0
  %793 = vmatpush2.msra.mxu0 0.0
  %794 = vmatprep.subr.mxu0 0.0
  %795 = vmatpush2.msra.mxu0 0.0
  %796 = vmatprep.subr.mxu0 0.0
  %797 = vmatpush2.msra.mxu0 0.0
  %798 = vmatprep.subr.mxu0 0.0
  %799 = vmatpush2.msra.mxu0 0.0
  %800 = vmatprep.subr.mxu0 0.0
  %801 = vmatpush2.msra.mxu0 0.0
  %802 = vmatprep.subr.mxu0 0.0
  %803 = vmatpush2.msra.mxu0 0.0
  %804 = vmatprep.subr.mxu0 0.0
  %805 = vmatpush2.msra.mxu0 0.0
  %806 = vmatprep.subr.mxu0 0.0
  %807 = vmatpush2.msra.mxu0 0.0
  %808 = vmatprep.mubr.f32.mxu0 0.0
  %809 = vmatmul.mubr.f32.gmra.mxu0 %v742
  %v810 = vpop.f32.mrf.mxu0
  %v811 = vadd.f32 0.0, %v810
  %v812 = vpop.f32.mrf.mxu0
  %813 = vdwg.mxu0
  %v814 = vmax.f32 %v811, 0.0
  %v815 = vld [vmem:[%s5] sm:$0xff]
  %v816 = vld [vmem:[%s5 + $0x8] sm:$0xff]
  %v817 = vld [vmem:[%s5 + $0x10] sm:$0xff]
  %v818 = vld [vmem:[%s5 + $0x18] sm:$0xff]
  %v819 = vld [vmem:[%s5 + $0x20] sm:$0xff]
  %v820 = vld [vmem:[%s5 + $0x28] sm:$0xff]
  %v821 = vld [vmem:[%s5 + $0x30] sm:$0xff]
  %v822 = vld [vmem:[%s5 + $0x38] sm:$0xff]
  %v823 = vld [vmem:[%s5 + $0x40] sm:$0xff]
  %v824 = vld [vmem:[%s5 + $0x48] sm:$0xff]
  %v825 = vld [vmem:[%s5 + $0x50] sm:$0xff]
  %v826 = vld [vmem:[%s5 + $0x58] sm:$0xff]
  %v827 = vld [vmem:[%s5 + $0x60] sm:$0xff]
  %v828 = vld [vmem:[%s5 + $0x68] sm:$0xff]
  %v829 = vld [vmem:[%s5 + $0x70] sm:$0xff]
  %v830 = vld [vmem:[%s5 + $0x78] sm:$0xff]
  %831 = vmatprep.subr.mxu0 0.0
  %832 = vmatpush1.msra.mxu0 %v830
  %833 = vmatprep.subr.mxu0 0.0
  %834 = vmatpush1.msra.mxu0 %v829
  %835 = vmatprep.subr.mxu0 0.0
  %836 = vmatpush1.msra.mxu0 %v828
  %837 = vmatprep.subr.mxu0 0.0
  %838 = vmatpush1.msra.mxu0 %v827
  %839 = vmatprep.subr.mxu0 0.0
  %840 = vmatpush1.msra.mxu0 %v826
  %841 = vmatprep.subr.mxu0 0.0
  %842 = vmatpush1.msra.mxu0 %v825
  %843 = vmatprep.subr.mxu0 0.0
  %844 = vmatpush1.msra.mxu0 %v824
  %845 = vmatprep.subr.mxu0 0.0
  %846 = vmatpush1.msra.mxu0 %v823
  %847 = vmatprep.subr.mxu0 0.0
  %848 = vmatpush1.msra.mxu0 %v822
  %849 = vmatprep.subr.mxu0 0.0
  %850 = vmatpush1.msra.mxu0 %v821
  %851 = vmatprep.subr.mxu0 0.0
  %852 = vmatpush1.msra.mxu0 %v820
  %853 = vmatprep.subr.mxu0 0.0
  %854 = vmatpush1.msra.mxu0 %v819
  %855 = vmatprep.subr.mxu0 0.0
  %856 = vmatpush1.msra.mxu0 %v818
  %857 = vmatprep.subr.mxu0 0.0
  %858 = vmatpush1.msra.mxu0 %v817
  %859 = vmatprep.subr.mxu0 0.0
  %860 = vmatpush1.msra.mxu0 %v816
  %861 = vmatprep.subr.mxu0 0.0
  %862 = vmatpush1.msra.mxu0 %v815
  %863 = vmatprep.subr.mxu0 0.0
  %864 = vmatpush2.msra.mxu0 0.0
  %865 = vmatprep.subr.mxu0 0.0
  %866 = vmatpush2.msra.mxu0 0.0
  %867 = vmatprep.subr.mxu0 0.0
  %868 = vmatpush2.msra.mxu0 0.0
  %869 = vmatprep.subr.mxu0 0.0
  %870 = vmatpush2.msra.mxu0 0.0
  %871 = vmatprep.subr.mxu0 0.0
  %872 = vmatpush2.msra.mxu0 0.0
  %873 = vmatprep.subr.mxu0 0.0
  %874 = vmatpush2.msra.mxu0 0.0
  %875 = vmatprep.subr.mxu0 0.0
  %876 = vmatpush2.msra.mxu0 0.0
  %877 = vmatprep.subr.mxu0 0.0
  %878 = vmatpush2.msra.mxu0 0.0
  %879 = vmatprep.subr.mxu0 0.0
  %880 = vmatpush2.msra.mxu0 0.0
  %881 = vmatprep.subr.mxu0 0.0
  %882 = vmatpush2.msra.mxu0 0.0
  %883 = vmatprep.subr.mxu0 0.0
  %884 = vmatpush2.msra.mxu0 0.0
  %885 = vmatprep.subr.mxu0 0.0
  %886 = vmatpush2.msra.mxu0 0.0
  %887 = vmatprep.subr.mxu0 0.0
  %888 = vmatpush2.msra.mxu0 0.0
  %889 = vmatprep.subr.mxu0 0.0
  %890 = vmatpush2.msra.mxu0 0.0
  %891 = vmatprep.subr.mxu0 0.0
  %892 = vmatpush2.msra.mxu0 0.0
  %893 = vmatprep.subr.mxu0 0.0
  %894 = vmatpush2.msra.mxu0 0.0
  %895 = vmatprep.mubr.f32.mxu0 0.0
  %896 = vmatmul.mubr.f32.gmra.mxu0 %v814
  %v897 = vpop.f32.mrf.mxu0
  %v898 = vadd.f32 0.0, %v897
  %v899 = vpop.f32.mrf.mxu0
  %900 = vdwg.mxu0
  %v901 = vxor.u32 %v898, 2147483648
  %v902 = vmul.f32 %v901, 1.442695
  %v903 = vpow.pop %v902
  %v904 = vadd.f32 %v903, 1.0
  %v905 = vrcp.pop %v904
  %v906 = vmul.f32 1.0, %v905
  %v909 = vunpack.c.l.s4 1966171168
  %v910 = vunpack.c.0.s8 %v909
  %v911 = vlaneseq
  %v912 = vshrl.u32 %v911, 7
  %v913 = vsub.s32 %v910, %v912
  %v914 = vrot.slane %v906, %v913
  %v915 = vcombine.high %v914, %v914
  %v917 = vunpack.c.l.s4 1966171168
  %v918 = vunpack.c.0.s8 %v917
  %v919 = vlaneseq
  %v920 = vshrl.u32 %v919, 7
  %v921 = vsub.s32 %v918, %v920
  %v922 = vrot.slane %v914, %v921
  %v924 = vunpack.c.l.s4 1966171168
  %v925 = vunpack.c.0.s8 %v924
  %v926 = vlaneseq
  %v927 = vshrl.u32 %v926, 7
  %v928 = vsub.s32 %v925, %v927
  %v929 = vrot.slane %v915, %v928
  %v930 = vlaneseq
  %v931 = vshrl.u32 %v930, 7
  %v932 = vsub.s32 0, %v931
  %v933 = vrot.slane %v922, %v932
  %v934 = vlaneseq
  %v935 = vshrl.u32 %v934, 7
  %v936 = vsub.s32 0, %v935
  %v937 = vrot.slane %v929, %v936
  %v940 = vmul.f32 %v692, %v933
  %v941 = vmul.f32 %v695, %v933
  %v942 = vmul.f32 %v700, %v937
  %v943 = vmul.f32 %v703, %v937
  %v944 = vpack.c.bf16 %v79, %v78
  %v945 = vpack.c.bf16 %v111, %v110
  %v946 = vld [vmem:[%s6] sm:$0xf]
  %v947 = vld [vmem:[%s6 + $0x4] sm:$0xf]
  %v948 = vld [vmem:[%s6 + $0x8] sm:$0xf]
  %v949 = vld [vmem:[%s6 + $0xc] sm:$0xf]
  %v950 = vld [vmem:[%s6 + $0x10] sm:$0xf]
  %v951 = vld [vmem:[%s6 + $0x14] sm:$0xf]
  %v952 = vld [vmem:[%s6 + $0x18] sm:$0xf]
  %v953 = vld [vmem:[%s6 + $0x1c] sm:$0xf]
  %v954 = vld [vmem:[%s6 + $0x20] sm:$0xf]
  %v955 = vld [vmem:[%s6 + $0x24] sm:$0xf]
  %v956 = vld [vmem:[%s6 + $0x28] sm:$0xf]
  %v957 = vld [vmem:[%s6 + $0x2c] sm:$0xf]
  %v958 = vld [vmem:[%s6 + $0x30] sm:$0xf]
  %v959 = vld [vmem:[%s6 + $0x34] sm:$0xf]
  %v960 = vld [vmem:[%s6 + $0x38] sm:$0xf]
  %v961 = vld [vmem:[%s6 + $0x3c] sm:$0xf]
  %v962 = vld [vmem:[%s7] sm:$0x1]
  %v964 = vlaneseq
  %v965 = vshrl.u32 %v964, 7
  %v966 = vsub.s32 0, %v965
  %v967 = vrot.slane %v962, %v966
  %v985 = vunpack.c.l.b16 %v946
  %v986 = vunpack.c.l.b16 %v947
  %v987 = vunpack.c.l.b16 %v948
  %v988 = vunpack.c.l.b16 %v949
  %v989 = vunpack.c.l.b16 %v950
  %v990 = vunpack.c.l.b16 %v951
  %v991 = vunpack.c.l.b16 %v952
  %v992 = vunpack.c.l.b16 %v953
  %v993 = vunpack.c.l.b16 %v954
  %v994 = vunpack.c.l.b16 %v955
  %v995 = vunpack.c.l.b16 %v956
  %v996 = vunpack.c.l.b16 %v957
  %v997 = vunpack.c.l.b16 %v958
  %v998 = vunpack.c.l.b16 %v959
  %v999 = vunpack.c.l.b16 %v960
  %v1000 = vunpack.c.l.b16 %v961
  %v1001 = vpack.c.b16 %v986, %v985
  %v1002 = vpack.c.b16 %v988, %v987
  %v1003 = vpack.c.b16 %v990, %v989
  %v1004 = vpack.c.b16 %v992, %v991
  %v1005 = vpack.c.b16 %v994, %v993
  %v1006 = vpack.c.b16 %v996, %v995
  %v1007 = vpack.c.b16 %v998, %v997
  %v1008 = vpack.c.b16 %v1000, %v999
  %1017 = vmatprep.subr.bf16.mxu0 0
  %1018 = vmatpush1.bf16.msra.mxu0 %v1008
  %1019 = vmatprep.subr.bf16.mxu0 0
  %1020 = vmatpush1.bf16.msra.mxu0 %v1007
  %1021 = vmatprep.subr.bf16.mxu0 0
  %1022 = vmatpush1.bf16.msra.mxu0 %v1006
  %1023 = vmatprep.subr.bf16.mxu0 0
  %1024 = vmatpush1.bf16.msra.mxu0 %v1005
  %1025 = vmatprep.subr.bf16.mxu0 0
  %1026 = vmatpush1.bf16.msra.mxu0 %v1004
  %1027 = vmatprep.subr.bf16.mxu0 0
  %1028 = vmatpush1.bf16.msra.mxu0 %v1003
  %1029 = vmatprep.subr.bf16.mxu0 0
  %1030 = vmatpush1.bf16.msra.mxu0 %v1002
  %1031 = vmatprep.subr.bf16.mxu0 0
  %1032 = vmatpush1.bf16.msra.mxu0 %v1001
  %1033 = vmatprep.subr.bf16.mxu0 0
  %1034 = vmatpush2.bf16.msra.mxu0 0
  %1035 = vmatprep.subr.bf16.mxu0 0
  %1036 = vmatpush2.bf16.msra.mxu0 0
  %1037 = vmatprep.subr.bf16.mxu0 0
  %1038 = vmatpush2.bf16.msra.mxu0 0
  %1039 = vmatprep.subr.bf16.mxu0 0
  %1040 = vmatpush2.bf16.msra.mxu0 0
  %1041 = vmatprep.subr.bf16.mxu0 0
  %1042 = vmatpush2.bf16.msra.mxu0 0
  %1043 = vmatprep.subr.bf16.mxu0 0
  %1044 = vmatpush2.bf16.msra.mxu0 0
  %1045 = vmatprep.subr.bf16.mxu0 0
  %1046 = vmatpush2.bf16.msra.mxu0 0
  %1047 = vmatprep.subr.bf16.mxu0 0
  %1048 = vmatpush2.bf16.msra.mxu0 0
  %1049 = vmatprep.mubr.bf16.mxu0 0
  %1050 = vmatmul.mubr.bf16.gmra.mxu0 %v944
  %v1051 = vpop.f32.mrf.mxu0
  %v1052 = vadd.f32 %v967, %v1051
  %v1053 = vpop.f32.mrf.mxu0
  %v1054 = vpop.f32.mrf.mxu0
  %v1055 = vadd.f32 %v967, %v1054
  %v1056 = vpop.f32.mrf.mxu0
  %1057 = vmatprep.mubr.bf16.mxu0 0
  %1058 = vmatmul.mubr.bf16.gmra.mxu0 %v945
  %v1059 = vpop.f32.mrf.mxu0
  %v1060 = vadd.f32 %v967, %v1059
  %v1061 = vpop.f32.mrf.mxu0
  %v1062 = vpop.f32.mrf.mxu0
  %v1063 = vadd.f32 %v967, %v1062
  %v1064 = vpop.f32.mrf.mxu0
  %1065 = vdwg.mxu0
  %v1066 = vadd.f32 %v1052, %v940
  %v1067 = vadd.f32 %v1055, %v941
  %v1068 = vadd.f32 %v1060, %v942
  %v1069 = vadd.f32 %v1063, %v943
  %v1070 = vmax.f32 %v1066, 0.0
  %v1071 = vmax.f32 %v1067, 0.0
  %v1072 = vmax.f32 %v1068, 0.0
  %v1073 = vmax.f32 %v1069, 0.0
  %1074 = vxpose.xlu0.b32.start [1/16] %v1070, 128
  %1075 = vxpose.xlu0.b32.cont [2/16] %v1071, 128
  %1076 = vxpose.xlu0.b32.cont [3/16] 0.0, 128
  %1077 = vxpose.xlu0.b32.cont [4/16] 0.0, 128
  %1078 = vxpose.xlu0.b32.cont [5/16] 0.0, 128
  %1079 = vxpose.xlu0.b32.cont [6/16] 0.0, 128
  %1080 = vxpose.xlu0.b32.cont [7/16] 0.0, 128
  %1081 = vxpose.xlu0.b32.cont [8/16] 0.0, 128
  %1082 = vxpose.xlu0.b32.cont [9/16] 0.0, 128
  %1083 = vxpose.xlu0.b32.cont [10/16] 0.0, 128
  %1084 = vxpose.xlu0.b32.cont [11/16] 0.0, 128
  %1085 = vxpose.xlu0.b32.cont [12/16] 0.0, 128
  %1086 = vxpose.xlu0.b32.cont [13/16] 0.0, 128
  %1087 = vxpose.xlu0.b32.cont [14/16] 0.0, 128
  %1088 = vxpose.xlu0.b32.cont [15/16] 0.0, 128
  %1089 = vxpose.xlu0.b32.end [16/16] 0.0, 128
  %v1090 = vpop.trf.xlu0
  %v1091 = vpop.trf.xlu0
  %v1092 = vpop.trf.xlu0
  %v1093 = vpop.trf.xlu0
  %v1094 = vpop.trf.xlu0
  %v1095 = vpop.trf.xlu0
  %v1096 = vpop.trf.xlu0
  %v1097 = vpop.trf.xlu0
  %v1098 = vpop.trf.xlu0
  %v1099 = vpop.trf.xlu0
  %v1100 = vpop.trf.xlu0
  %v1101 = vpop.trf.xlu0
  %v1102 = vpop.trf.xlu0
  %v1103 = vpop.trf.xlu0
  %v1104 = vpop.trf.xlu0
  %v1105 = vpop.trf.xlu0
  %1106 = vxpose.xlu0.b32.start [1/16] %v1072, 128
  %1107 = vxpose.xlu0.b32.cont [2/16] %v1073, 128
  %1108 = vxpose.xlu0.b32.cont [3/16] 0.0, 128
  %1109 = vxpose.xlu0.b32.cont [4/16] 0.0, 128
  %1110 = vxpose.xlu0.b32.cont [5/16] 0.0, 128
  %1111 = vxpose.xlu0.b32.cont [6/16] 0.0, 128
  %1112 = vxpose.xlu0.b32.cont [7/16] 0.0, 128
  %1113 = vxpose.xlu0.b32.cont [8/16] 0.0, 128
  %1114 = vxpose.xlu0.b32.cont [9/16] 0.0, 128
  %1115 = vxpose.xlu0.b32.cont [10/16] 0.0, 128
  %1116 = vxpose.xlu0.b32.cont [11/16] 0.0, 128
  %1117 = vxpose.xlu0.b32.cont [12/16] 0.0, 128
  %1118 = vxpose.xlu0.b32.cont [13/16] 0.0, 128
  %1119 = vxpose.xlu0.b32.cont [14/16] 0.0, 128
  %1120 = vxpose.xlu0.b32.cont [15/16] 0.0, 128
  %1121 = vxpose.xlu0.b32.end [16/16] 0.0, 128
  %v1122 = vpop.trf.xlu0
  %v1123 = vpop.trf.xlu0
  %v1124 = vpop.trf.xlu0
  %v1125 = vpop.trf.xlu0
  %v1126 = vpop.trf.xlu0
  %v1127 = vpop.trf.xlu0
  %v1128 = vpop.trf.xlu0
  %v1129 = vpop.trf.xlu0
  %v1130 = vpop.trf.xlu0
  %v1131 = vpop.trf.xlu0
  %v1132 = vpop.trf.xlu0
  %v1133 = vpop.trf.xlu0
  %v1134 = vpop.trf.xlu0
  %v1135 = vpop.trf.xlu0
  %v1136 = vpop.trf.xlu0
  %v1137 = vpop.trf.xlu0
  %vm1138 = vcmask 130048
  %1139 = vst.msk [vmem:[%s8] sm:$0xff] %vm1138, %v1090
  %1140 = vst.msk [vmem:[%s8 + $0x8] sm:$0xff] %vm1138, %v1091
  %1141 = vst.msk [vmem:[%s8 + $0x10] sm:$0xff] %vm1138, %v1092
  %1142 = vst.msk [vmem:[%s8 + $0x18] sm:$0xff] %vm1138, %v1093
  %1143 = vst.msk [vmem:[%s8 + $0x20] sm:$0xff] %vm1138, %v1094
  %1144 = vst.msk [vmem:[%s8 + $0x28] sm:$0xff] %vm1138, %v1095
  %1145 = vst.msk [vmem:[%s8 + $0x30] sm:$0xff] %vm1138, %v1096
  %1146 = vst.msk [vmem:[%s8 + $0x38] sm:$0xff] %vm1138, %v1097
  %1147 = vst.msk [vmem:[%s8 + $0x40] sm:$0xff] %vm1138, %v1098
  %1148 = vst.msk [vmem:[%s8 + $0x48] sm:$0xff] %vm1138, %v1099
  %1149 = vst.msk [vmem:[%s8 + $0x50] sm:$0xff] %vm1138, %v1100
  %1150 = vst.msk [vmem:[%s8 + $0x58] sm:$0xff] %vm1138, %v1101
  %1151 = vst.msk [vmem:[%s8 + $0x60] sm:$0xff] %vm1138, %v1102
  %1152 = vst.msk [vmem:[%s8 + $0x68] sm:$0xff] %vm1138, %v1103
  %1153 = vst.msk [vmem:[%s8 + $0x70] sm:$0xff] %vm1138, %v1104
  %1154 = vst.msk [vmem:[%s8 + $0x78] sm:$0xff] %vm1138, %v1105
  %1155 = vst.msk [vmem:[%s8 + $0x80] sm:$0xff] %vm1138, %v1122
  %1156 = vst.msk [vmem:[%s8 + $0x88] sm:$0xff] %vm1138, %v1123
  %1157 = vst.msk [vmem:[%s8 + $0x90] sm:$0xff] %vm1138, %v1124
  %1158 = vst.msk [vmem:[%s8 + $0x98] sm:$0xff] %vm1138, %v1125
  %1159 = vst.msk [vmem:[%s8 + $0xa0] sm:$0xff] %vm1138, %v1126
  %1160 = vst.msk [vmem:[%s8 + $0xa8] sm:$0xff] %vm1138, %v1127
  %1161 = vst.msk [vmem:[%s8 + $0xb0] sm:$0xff] %vm1138, %v1128
  %1162 = vst.msk [vmem:[%s8 + $0xb8] sm:$0xff] %vm1138, %v1129
  %1163 = vst.msk [vmem:[%s8 + $0xc0] sm:$0xff] %vm1138, %v1130
  %1164 = vst.msk [vmem:[%s8 + $0xc8] sm:$0xff] %vm1138, %v1131
  %1165 = vst.msk [vmem:[%s8 + $0xd0] sm:$0xff] %vm1138, %v1132
  %1166 = vst.msk [vmem:[%s8 + $0xd8] sm:$0xff] %vm1138, %v1133
  %1167 = vst.msk [vmem:[%s8 + $0xe0] sm:$0xff] %vm1138, %v1134
  %1168 = vst.msk [vmem:[%s8 + $0xe8] sm:$0xff] %vm1138, %v1135
  %1169 = vst.msk [vmem:[%s8 + $0xf0] sm:$0xff] %vm1138, %v1136
  %1170 = vst.msk [vmem:[%s8 + $0xf8] sm:$0xff] %vm1138, %v1137
  // Predicated region
  $region34: #{megablock_forward.1} parent=0 // pred_check
    _
  $region35: #{megablock_forward.1} parent=0 // pred_check_branch
    %1172 = sbr.rel (0) target = $region37
  $region36: #{megablock_forward.1} parent=0 // pred_region
    _
  $region37: #{megablock_forward.1} parent=0 // pred_fallthru
    _
  // Predicated region
  $region38: #{megablock_forward.1} parent=0 // pred_check
    _
  $region39: #{megablock_forward.1} parent=0 // pred_check_branch
    %1174 = sbr.rel (0) target = $region41
  $region40: #{megablock_forward.1} parent=0 // pred_region
    _
  $region41: #{megablock_forward.1} parent=0 // pred_fallthru
    _

</llo_original>
